<compile_context>
chip_gen: v6e
topology: v6e:2x2x1
jax: 0.10.0
libtpu: 0.0.40
codegen_flags: <defaults>
</compile_context>

<pallas_src>
import math
import functools

import jax
import jax.numpy as jnp
from jax.experimental import pallas as pl
from jax.experimental.pallas import tpu as pltpu


# -----------------------------------------------------------------------------
# Fused Pallas kernel: embed + pre residual blocks + max-over-K + pos residual
# -----------------------------------------------------------------------------
def _fused_extraction_kernel(x_ref, ew_ref, eb_ref,
                             prw1_ref, prb1_ref, prw2_ref, prb2_ref,
                             pow1_ref, pob1_ref, pow2_ref, pob2_ref,
                             o_ref, *, k, n_pre, n_pos):
    tg, c = o_ref.shape                      # groups in this tile, out channels

    x = x_ref[...]                           # [tg*k, d2] bf16 (neighbour rows)

    # transfer_embed: Conv1d(k=1) + folded BN + ReLU.  f32 MXU accumulation.
    h = jnp.dot(x, ew_ref[...], preferred_element_type=jnp.float32) + eb_ref[...]
    h = jnp.maximum(h, 0.0)                  # [tg*k, C] f32

    def res_block(h, w1, b1, w2, b2):
        # act( BN2(Conv2( act(BN1(Conv1(h))) )) + h ) with BN folded.
        t = jnp.dot(h.astype(jnp.bfloat16), w1,
                    preferred_element_type=jnp.float32) + b1
        t = jnp.maximum(t, 0.0)
        t = jnp.dot(t.astype(jnp.bfloat16), w2,
                    preferred_element_type=jnp.float32) + b2 + h   # residual in f32
        return jnp.maximum(t, 0.0)

    # pre_extractor (per neighbour position)
    for i in range(n_pre):
        h = res_block(h, prw1_ref[i], prb1_ref[i], prw2_ref[i], prb2_ref[i])

    # adaptive_max_pool1d(., 1): max over the K neighbours, on-chip.
    h = jnp.max(h.reshape(tg, k, c), axis=1)                       # [tg, C] f32

    # pos_extractor (per sampled point)
    for i in range(n_pos):
        h = res_block(h, pow1_ref[i], pob1_ref[i], pow2_ref[i], pob2_ref[i])

    o_ref[...] = h.astype(o_ref.dtype)


def _choose_group_tile(g, k, d2, c, h, vmem_budget=20 * 1024 * 1024):
    """Pick the per-step group tile.

    Budgeted so (double-buffered bf16 input tile + ~4 live f32 intermediates +
    output) stays well inside v7x's 64 MiB physical VMEM; clamped so the grid
    has >= 2 steps (both v7x TensorCores get work) and aligned to sublanes.
    """
    cmax = max(d2, c, h)
    per_group = k * d2 * 2 * 2 + k * cmax * 4 * 4 + c * 4 * 2
    tg = max(1, vmem_budget // per_group)
    tg = min(tg, 1024)                       # per-step overhead already amortized
    tg = min(tg, max(8, (g + 1) // 2))       # keep >= 2 grid steps when possible
    tg = max(8, (tg // 8) * 8)               # sublane alignment
    return int(tg)


def fused_extraction(grouped, params):
    """grouped: [G, K, d2] float -> pooled/processed features [G, C] f32."""
    g, k, d2 = grouped.shape
    c = params["embed_wt"].shape[1]
    hdim = params["pre_w1"].shape[2]
    n_pre = params["pre_w1"].shape[0]
    n_pos = params["pos_w1"].shape[0]

    tg = _choose_group_tile(g, k, d2, c, hdim)
    g_pad = ((g + tg - 1) // tg) * tg
    if g_pad != g:
        # Zero-pad extra groups; they are independent of real groups (max is
        # per-group) and are sliced off afterwards.
        grouped = jnp.pad(grouped, ((0, g_pad - g), (0, 0), (0, 0)))

    # Channel-last rows, bf16 for HBM traffic / MXU inputs.
    x_flat = grouped.reshape(g_pad * k, d2).astype(jnp.bfloat16)

    kernel = functools.partial(_fused_extraction_kernel,
                               k=k, n_pre=n_pre, n_pos=n_pos)

    # NOTE: with small out_channels (<128) the output stores are lane-masked;
    # real PointMLP stages have C >= 128 which makes the out block lane-dense.
    out = pl.pallas_call(
        kernel,
        out_shape=jax.ShapeDtypeStruct((g_pad, c), jnp.float32),
        grid=(g_pad // tg,),
        in_specs=[
            pl.BlockSpec((tg * k, d2), lambda i: (i, 0)),          # activations
            pl.BlockSpec((d2, c), lambda i: (0, 0)),               # embed W
            pl.BlockSpec((1, c), lambda i: (0, 0)),                # embed b
            pl.BlockSpec((n_pre, c, hdim), lambda i: (0, 0, 0)),   # pre W1
            pl.BlockSpec((n_pre, 1, hdim), lambda i: (0, 0, 0)),   # pre b1
            pl.BlockSpec((n_pre, hdim, c), lambda i: (0, 0, 0)),   # pre W2
            pl.BlockSpec((n_pre, 1, c), lambda i: (0, 0, 0)),      # pre b2
            pl.BlockSpec((n_pos, c, hdim), lambda i: (0, 0, 0)),   # pos W1
            pl.BlockSpec((n_pos, 1, hdim), lambda i: (0, 0, 0)),   # pos b1
            pl.BlockSpec((n_pos, hdim, c), lambda i: (0, 0, 0)),   # pos W2
            pl.BlockSpec((n_pos, 1, c), lambda i: (0, 0, 0)),      # pos b2
        ],
        out_specs=pl.BlockSpec((tg, c), lambda i: (i, 0)),
        compiler_params=pltpu.CompilerParams(
            dimension_semantics=("parallel",),
            vmem_limit_bytes=48 * 1024 * 1024,
        ),
    )(x_flat,
      params["embed_wt"], params["embed_b"],
      params["pre_w1"], params["pre_b1"], params["pre_w2"], params["pre_b2"],
      params["pos_w1"], params["pos_b1"], params["pos_w2"], params["pos_b2"])

    return out[:g]


# -----------------------------------------------------------------------------
# LocalGrouper (plain JAX glue: FPS + kNN + gather) — data-dependent, kept in XLA
# -----------------------------------------------------------------------------
def _index_points(points, idx):
    b = points.shape[0]
    batch_idx = jnp.arange(b).reshape((b,) + (1,) * (idx.ndim - 1))
    return points[batch_idx, idx]


def farthest_point_sample(xyz, npoint):
    # Deterministic FPS (first index 0 instead of PyTorch's random start).
    b, n, _ = xyz.shape

    def body(i, state):
        centroids, distance, farthest = state
        centroids = centroids.at[:, i].set(farthest)
        centroid = xyz[jnp.arange(b), farthest][:, None, :]
        d = jnp.sum((xyz - centroid) ** 2, axis=-1)
        distance = jnp.minimum(distance, d)
        farthest = jnp.argmax(distance, axis=-1).astype(jnp.int32)
        return centroids, distance, farthest

    init = (
        jnp.zeros((b, npoint), jnp.int32),
        jnp.full((b, n), 1e10, jnp.float32),
        jnp.zeros((b,), jnp.int32),
    )
    centroids, _, _ = jax.lax.fori_loop(0, npoint, body, init)
    return centroids


def local_grouper(xyz, feat, num_samples, k_neighbors, use_xyz=False):
    fps_idx = farthest_point_sample(xyz, num_samples)                # [B,S]
    new_xyz = _index_points(xyz, fps_idx)                            # [B,S,3]
    center_feat = _index_points(feat, fps_idx)                       # [B,S,D]

    d2 = jnp.sum((new_xyz[:, :, None, :] - xyz[:, None, :, :]) ** 2, axis=-1)
    _, knn_idx = jax.lax.top_k(-d2, k_neighbors)                     # [B,S,K]

    grouped_feat = _index_points(feat, knn_idx)                      # [B,S,K,D]
    if use_xyz:
        grouped_xyz = _index_points(xyz, knn_idx)
        grouped_feat = jnp.concatenate([grouped_feat, grouped_xyz], axis=-1)

    k = k_neighbors
    center_tiled = jnp.broadcast_to(
        center_feat[:, :, None, :],
        center_feat.shape[:2] + (k, center_feat.shape[-1]),
    )
    new_feat = jnp.concatenate([grouped_feat, center_tiled], axis=-1)
    return new_xyz, new_feat


# -----------------------------------------------------------------------------
# Parameter construction (deterministic, synthetic) + BN folding
# -----------------------------------------------------------------------------
def _fold_conv_bn(w, gamma, beta, eps=1e-5):
    # Conv1d(k=1, bias=False) weight w:[Cout,Cin]; eval-mode BN (mean=0, var=1).
    scale = gamma / jnp.sqrt(1.0 + eps)
    wt = (w * scale[:, None]).T                                      # [Cin,Cout]
    bias = beta[None, :]                                             # [1,Cout]
    return wt.astype(jnp.bfloat16), bias.astype(jnp.float32)


def make_extraction_block_params(key, in_channels, out_channels, residual_factor=1.0,
                                 pre_block=2, pos_block=2, use_xyz=False):
    d2 = in_channels * 2 + (3 if use_xyz else 0)
    hidden = int(round(out_channels * residual_factor))
    keys = iter(jax.random.split(key, 4 + 8 * (pre_block + pos_block)))

    def conv_w(k, cout, cin):
        return jax.random.normal(k, (cout, cin), jnp.float32) / math.sqrt(cin)

    def bn(k, c):
        k1, k2 = jax.random.split(k)
        gamma = 1.0 + 0.1 * jax.random.normal(k1, (c,), jnp.float32)
        beta = 0.1 * jax.random.normal(k2, (c,), jnp.float32)
        return gamma, beta

    # transfer_embed: Conv1d(d2 -> out) + BN
    w = conv_w(next(keys), out_channels, d2)
    g, b = bn(next(keys), out_channels)
    embed_wt, embed_b = _fold_conv_bn(w, g, b)

    def make_res_block():
        w1 = conv_w(next(keys), hidden, out_channels)
        g1, b1 = bn(next(keys), hidden)
        w2 = conv_w(next(keys), out_channels, hidden)
        g2, b2 = bn(next(keys), out_channels)
        w1t, bb1 = _fold_conv_bn(w1, g1, b1)
        w2t, bb2 = _fold_conv_bn(w2, g2, b2)
        return w1t, bb1, w2t, bb2

    pre = [make_res_block() for _ in range(pre_block)]
    pos = [make_res_block() for _ in range(pos_block)]

    def stack(blocks, j):
        return jnp.stack([blk[j] for blk in blocks], axis=0)

    return {
        "embed_wt": embed_wt, "embed_b": embed_b,
        "pre_w1": stack(pre, 0), "pre_b1": stack(pre, 1),
        "pre_w2": stack(pre, 2), "pre_b2": stack(pre, 3),
        "pos_w1": stack(pos, 0), "pos_b1": stack(pos, 1),
        "pos_w2": stack(pos, 2), "pos_b2": stack(pos, 3),
    }


# -----------------------------------------------------------------------------
# ExtractionBlock forward (jitted: glue + fused Pallas kernel in one program)
# -----------------------------------------------------------------------------
@functools.partial(jax.jit, static_argnames=("num_samples", "k_neighbors", "use_xyz"))
def extraction_block_forward(params, xyz, feat, *, num_samples, k_neighbors,
                             use_xyz=False):
    new_xyz, grouped = local_grouper(xyz, feat, num_samples, k_neighbors, use_xyz)
    bsz, s, k, d2 = grouped.shape
    c_out = params["embed_wt"].shape[1]
    # PyTorch reuses feat_dims (=d2) for the post-pool view -> requires c_out == d2.
    assert c_out == d2, "PyTorch .view() requires out_channels == 2*in_channels (+3 if use_xyz)"

    # [B,S,K,d2] -> [B*S, K, d2]; fused kernel: embed -> pre x n -> max_K -> pos x n
    pooled = fused_extraction(grouped.reshape(bsz * s, k, d2), params)   # [B*S, C] f32

    # back to PyTorch layout [B, C, S]
    new_feat = pooled.reshape(bsz, s, c_out).transpose(0, 2, 1)
    return new_xyz, new_feat


# -----------------------------------------------------------------------------
if __name__ == "__main__":
    # small shapes: B=2 clouds, N=32 points, in_channels=16, out_channels=32,
    # num_samples=8, k_neighbors=8
    B, N = 2, 32
    in_channels, out_channels = 16, 32
    num_samples, k_neighbors = 8, 8

    key = jax.random.PRNGKey(0)
    k_xyz, k_feat, k_par = jax.random.split(key, 3)
    xyz = jax.random.normal(k_xyz, (B, N, 3), jnp.float32)
    feat = jax.random.normal(k_feat, (B, N, in_channels), jnp.float32)

    params = make_extraction_block_params(k_par, in_channels, out_channels)

    new_xyz, new_feat = extraction_block_forward(
        params, xyz, feat,
        num_samples=num_samples, k_neighbors=k_neighbors, use_xyz=False)
    jax.block_until_ready((new_xyz, new_feat))

    assert new_xyz.shape == (B, num_samples, 3)
    assert new_feat.shape == (B, out_channels, num_samples)
    assert bool(jnp.all(jnp.isfinite(new_feat)))
    print("KERNEL_OK")
</pallas_src>

<mosaic_0001>
module attributes {stable_mosaic.version = 11 : i64} {
  func.func @_fused_extraction_kernel(%arg0: i32, %arg1: memref<64x32xbf16, #tpu.memory_space<vmem>>, %arg2: memref<32x32xbf16, #tpu.memory_space<vmem>>, %arg3: memref<1x32xf32, #tpu.memory_space<vmem>>, %arg4: memref<2x32x32xbf16, #tpu.memory_space<vmem>>, %arg5: memref<2x1x32xf32, #tpu.memory_space<vmem>>, %arg6: memref<2x32x32xbf16, #tpu.memory_space<vmem>>, %arg7: memref<2x1x32xf32, #tpu.memory_space<vmem>>, %arg8: memref<2x32x32xbf16, #tpu.memory_space<vmem>>, %arg9: memref<2x1x32xf32, #tpu.memory_space<vmem>>, %arg10: memref<2x32x32xbf16, #tpu.memory_space<vmem>>, %arg11: memref<2x1x32xf32, #tpu.memory_space<vmem>>, %arg12: memref<8x32xf32, #tpu.memory_space<vmem>>) attributes {dimension_semantics = [#tpu.dimension_semantics<parallel>], iteration_bounds = array<i64: 2>, scalar_prefetch = 0 : i64, scratch_operands = 0 : i64, tpu.core_type = #tpu.core_type<tc>, window_params = [{transform_indices = @transform_0, window_bounds = array<i64: 64, 32>}, {pipeline_mode = #tpu.pipeline_mode<synchronous>, transform_indices = @transform_1, window_bounds = array<i64: 32, 32>}, {pipeline_mode = #tpu.pipeline_mode<synchronous>, transform_indices = @transform_2, window_bounds = array<i64: 1, 32>}, {pipeline_mode = #tpu.pipeline_mode<synchronous>, transform_indices = @transform_3, window_bounds = array<i64: 2, 32, 32>}, {pipeline_mode = #tpu.pipeline_mode<synchronous>, transform_indices = @transform_4, window_bounds = array<i64: 2, 1, 32>}, {pipeline_mode = #tpu.pipeline_mode<synchronous>, transform_indices = @transform_5, window_bounds = array<i64: 2, 32, 32>}, {pipeline_mode = #tpu.pipeline_mode<synchronous>, transform_indices = @transform_6, window_bounds = array<i64: 2, 1, 32>}, {pipeline_mode = #tpu.pipeline_mode<synchronous>, transform_indices = @transform_7, window_bounds = array<i64: 2, 32, 32>}, {pipeline_mode = #tpu.pipeline_mode<synchronous>, transform_indices = @transform_8, window_bounds = array<i64: 2, 1, 32>}, {pipeline_mode = #tpu.pipeline_mode<synchronous>, transform_indices = @transform_9, window_bounds = array<i64: 2, 32, 32>}, {pipeline_mode = #tpu.pipeline_mode<synchronous>, transform_indices = @transform_10, window_bounds = array<i64: 2, 1, 32>}, {transform_indices = @transform_11, window_bounds = array<i64: 8, 32>}]} {
    %c0 = arith.constant 0 : index
    %c0_0 = arith.constant 0 : index
    %0 = vector.load %arg1[%c0, %c0_0] : memref<64x32xbf16, #tpu.memory_space<vmem>>, vector<64x32xbf16>
    %c0_1 = arith.constant 0 : index
    %c0_2 = arith.constant 0 : index
    %1 = vector.load %arg2[%c0_1, %c0_2] : memref<32x32xbf16, #tpu.memory_space<vmem>>, vector<32x32xbf16>
    %cst = arith.constant dense<0.000000e+00> : vector<64x32xf32>
    %2 = tpu.matmul %0, %1, %cst {dimension_numbers = #tpu.dot_dimension_numbers<[1], [0], [0], [1], [0, 0, 1, 1], [], []>} : vector<64x32xbf16>, vector<32x32xbf16>, vector<64x32xf32> -> vector<64x32xf32>
    %c0_3 = arith.constant 0 : index
    %c0_4 = arith.constant 0 : index
    %3 = vector.load %arg3[%c0_3, %c0_4] : memref<1x32xf32, #tpu.memory_space<vmem>>, vector<1x32xf32>
    %4 = vector.broadcast %3 : vector<1x32xf32> to vector<64x32xf32>
    %5 = arith.addf %2, %4 : vector<64x32xf32>
    %cst_5 = arith.constant 0.000000e+00 : f32
    %6 = vector.broadcast %cst_5 : f32 to vector<64x32xf32>
    %7 = arith.maximumf %5, %6 : vector<64x32xf32>
    %c0_6 = arith.constant 0 : index
    %c0_7 = arith.constant 0 : index
    %c0_8 = arith.constant 0 : index
    %8 = vector.load %arg4[%c0_6, %c0_7, %c0_8] : memref<2x32x32xbf16, #tpu.memory_space<vmem>>, vector<1x32x32xbf16>
    %9 = vector.shape_cast %8 : vector<1x32x32xbf16> to vector<32x32xbf16>
    %c0_9 = arith.constant 0 : index
    %c0_10 = arith.constant 0 : index
    %c0_11 = arith.constant 0 : index
    %10 = vector.load %arg5[%c0_9, %c0_10, %c0_11] : memref<2x1x32xf32, #tpu.memory_space<vmem>>, vector<1x1x32xf32>
    %11 = vector.shape_cast %10 : vector<1x1x32xf32> to vector<1x32xf32>
    %c0_12 = arith.constant 0 : index
    %c0_13 = arith.constant 0 : index
    %c0_14 = arith.constant 0 : index
    %12 = vector.load %arg6[%c0_12, %c0_13, %c0_14] : memref<2x32x32xbf16, #tpu.memory_space<vmem>>, vector<1x32x32xbf16>
    %13 = vector.shape_cast %12 : vector<1x32x32xbf16> to vector<32x32xbf16>
    %c0_15 = arith.constant 0 : index
    %c0_16 = arith.constant 0 : index
    %c0_17 = arith.constant 0 : index
    %14 = vector.load %arg7[%c0_15, %c0_16, %c0_17] : memref<2x1x32xf32, #tpu.memory_space<vmem>>, vector<1x1x32xf32>
    %15 = vector.shape_cast %14 : vector<1x1x32xf32> to vector<1x32xf32>
    %16 = arith.truncf %7 : vector<64x32xf32> to vector<64x32xbf16>
    %cst_18 = arith.constant dense<0.000000e+00> : vector<64x32xf32>
    %17 = tpu.matmul %16, %9, %cst_18 {dimension_numbers = #tpu.dot_dimension_numbers<[1], [0], [0], [1], [0, 0, 1, 1], [], []>} : vector<64x32xbf16>, vector<32x32xbf16>, vector<64x32xf32> -> vector<64x32xf32>
    %18 = vector.broadcast %11 : vector<1x32xf32> to vector<64x32xf32>
    %19 = arith.addf %17, %18 : vector<64x32xf32>
    %cst_19 = arith.constant 0.000000e+00 : f32
    %20 = vector.broadcast %cst_19 : f32 to vector<64x32xf32>
    %21 = arith.maximumf %19, %20 : vector<64x32xf32>
    %22 = arith.truncf %21 : vector<64x32xf32> to vector<64x32xbf16>
    %cst_20 = arith.constant dense<0.000000e+00> : vector<64x32xf32>
    %23 = tpu.matmul %22, %13, %cst_20 {dimension_numbers = #tpu.dot_dimension_numbers<[1], [0], [0], [1], [0, 0, 1, 1], [], []>} : vector<64x32xbf16>, vector<32x32xbf16>, vector<64x32xf32> -> vector<64x32xf32>
    %24 = vector.broadcast %15 : vector<1x32xf32> to vector<64x32xf32>
    %25 = arith.addf %23, %24 : vector<64x32xf32>
    %26 = arith.addf %25, %7 : vector<64x32xf32>
    %cst_21 = arith.constant 0.000000e+00 : f32
    %27 = vector.broadcast %cst_21 : f32 to vector<64x32xf32>
    %28 = arith.maximumf %26, %27 : vector<64x32xf32>
    %c1 = arith.constant 1 : index
    %c0_22 = arith.constant 0 : index
    %c0_23 = arith.constant 0 : index
    %29 = vector.load %arg4[%c1, %c0_22, %c0_23] : memref<2x32x32xbf16, #tpu.memory_space<vmem>>, vector<1x32x32xbf16>
    %30 = vector.shape_cast %29 : vector<1x32x32xbf16> to vector<32x32xbf16>
    %c1_24 = arith.constant 1 : index
    %c0_25 = arith.constant 0 : index
    %c0_26 = arith.constant 0 : index
    %31 = vector.load %arg5[%c1_24, %c0_25, %c0_26] : memref<2x1x32xf32, #tpu.memory_space<vmem>>, vector<1x1x32xf32>
    %32 = vector.shape_cast %31 : vector<1x1x32xf32> to vector<1x32xf32>
    %c1_27 = arith.constant 1 : index
    %c0_28 = arith.constant 0 : index
    %c0_29 = arith.constant 0 : index
    %33 = vector.load %arg6[%c1_27, %c0_28, %c0_29] : memref<2x32x32xbf16, #tpu.memory_space<vmem>>, vector<1x32x32xbf16>
    %34 = vector.shape_cast %33 : vector<1x32x32xbf16> to vector<32x32xbf16>
    %c1_30 = arith.constant 1 : index
    %c0_31 = arith.constant 0 : index
    %c0_32 = arith.constant 0 : index
    %35 = vector.load %arg7[%c1_30, %c0_31, %c0_32] : memref<2x1x32xf32, #tpu.memory_space<vmem>>, vector<1x1x32xf32>
    %36 = vector.shape_cast %35 : vector<1x1x32xf32> to vector<1x32xf32>
    %37 = arith.truncf %28 : vector<64x32xf32> to vector<64x32xbf16>
    %cst_33 = arith.constant dense<0.000000e+00> : vector<64x32xf32>
    %38 = tpu.matmul %37, %30, %cst_33 {dimension_numbers = #tpu.dot_dimension_numbers<[1], [0], [0], [1], [0, 0, 1, 1], [], []>} : vector<64x32xbf16>, vector<32x32xbf16>, vector<64x32xf32> -> vector<64x32xf32>
    %39 = vector.broadcast %32 : vector<1x32xf32> to vector<64x32xf32>
    %40 = arith.addf %38, %39 : vector<64x32xf32>
    %cst_34 = arith.constant 0.000000e+00 : f32
    %41 = vector.broadcast %cst_34 : f32 to vector<64x32xf32>
    %42 = arith.maximumf %40, %41 : vector<64x32xf32>
    %43 = arith.truncf %42 : vector<64x32xf32> to vector<64x32xbf16>
    %cst_35 = arith.constant dense<0.000000e+00> : vector<64x32xf32>
    %44 = tpu.matmul %43, %34, %cst_35 {dimension_numbers = #tpu.dot_dimension_numbers<[1], [0], [0], [1], [0, 0, 1, 1], [], []>} : vector<64x32xbf16>, vector<32x32xbf16>, vector<64x32xf32> -> vector<64x32xf32>
    %45 = vector.broadcast %36 : vector<1x32xf32> to vector<64x32xf32>
    %46 = arith.addf %44, %45 : vector<64x32xf32>
    %47 = arith.addf %46, %28 : vector<64x32xf32>
    %cst_36 = arith.constant 0.000000e+00 : f32
    %48 = vector.broadcast %cst_36 : f32 to vector<64x32xf32>
    %49 = arith.maximumf %47, %48 : vector<64x32xf32>
    %50 = vector.shape_cast %49 : vector<64x32xf32> to vector<8x8x32xf32>
    %cst_37 = arith.constant dense<0xFF800000> : vector<8x32xf32>
    %51 = vector.multi_reduction <maximumf>, %50, %cst_37 [1] : vector<8x8x32xf32> to vector<8x32xf32>
    %c0_38 = arith.constant 0 : index
    %c0_39 = arith.constant 0 : index
    %c0_40 = arith.constant 0 : index
    %52 = vector.load %arg8[%c0_38, %c0_39, %c0_40] : memref<2x32x32xbf16, #tpu.memory_space<vmem>>, vector<1x32x32xbf16>
    %53 = vector.shape_cast %52 : vector<1x32x32xbf16> to vector<32x32xbf16>
    %c0_41 = arith.constant 0 : index
    %c0_42 = arith.constant 0 : index
    %c0_43 = arith.constant 0 : index
    %54 = vector.load %arg9[%c0_41, %c0_42, %c0_43] : memref<2x1x32xf32, #tpu.memory_space<vmem>>, vector<1x1x32xf32>
    %55 = vector.shape_cast %54 : vector<1x1x32xf32> to vector<1x32xf32>
    %c0_44 = arith.constant 0 : index
    %c0_45 = arith.constant 0 : index
    %c0_46 = arith.constant 0 : index
    %56 = vector.load %arg10[%c0_44, %c0_45, %c0_46] : memref<2x32x32xbf16, #tpu.memory_space<vmem>>, vector<1x32x32xbf16>
    %57 = vector.shape_cast %56 : vector<1x32x32xbf16> to vector<32x32xbf16>
    %c0_47 = arith.constant 0 : index
    %c0_48 = arith.constant 0 : index
    %c0_49 = arith.constant 0 : index
    %58 = vector.load %arg11[%c0_47, %c0_48, %c0_49] : memref<2x1x32xf32, #tpu.memory_space<vmem>>, vector<1x1x32xf32>
    %59 = vector.shape_cast %58 : vector<1x1x32xf32> to vector<1x32xf32>
    %60 = arith.truncf %51 : vector<8x32xf32> to vector<8x32xbf16>
    %cst_50 = arith.constant dense<0.000000e+00> : vector<8x32xf32>
    %61 = tpu.matmul %60, %53, %cst_50 {dimension_numbers = #tpu.dot_dimension_numbers<[1], [0], [0], [1], [0, 0, 1, 1], [], []>} : vector<8x32xbf16>, vector<32x32xbf16>, vector<8x32xf32> -> vector<8x32xf32>
    %62 = vector.broadcast %55 : vector<1x32xf32> to vector<8x32xf32>
    %63 = arith.addf %61, %62 : vector<8x32xf32>
    %cst_51 = arith.constant 0.000000e+00 : f32
    %64 = vector.broadcast %cst_51 : f32 to vector<8x32xf32>
    %65 = arith.maximumf %63, %64 : vector<8x32xf32>
    %66 = arith.truncf %65 : vector<8x32xf32> to vector<8x32xbf16>
    %cst_52 = arith.constant dense<0.000000e+00> : vector<8x32xf32>
    %67 = tpu.matmul %66, %57, %cst_52 {dimension_numbers = #tpu.dot_dimension_numbers<[1], [0], [0], [1], [0, 0, 1, 1], [], []>} : vector<8x32xbf16>, vector<32x32xbf16>, vector<8x32xf32> -> vector<8x32xf32>
    %68 = vector.broadcast %59 : vector<1x32xf32> to vector<8x32xf32>
    %69 = arith.addf %67, %68 : vector<8x32xf32>
    %70 = arith.addf %69, %51 : vector<8x32xf32>
    %cst_53 = arith.constant 0.000000e+00 : f32
    %71 = vector.broadcast %cst_53 : f32 to vector<8x32xf32>
    %72 = arith.maximumf %70, %71 : vector<8x32xf32>
    %c1_54 = arith.constant 1 : index
    %c0_55 = arith.constant 0 : index
    %c0_56 = arith.constant 0 : index
    %73 = vector.load %arg8[%c1_54, %c0_55, %c0_56] : memref<2x32x32xbf16, #tpu.memory_space<vmem>>, vector<1x32x32xbf16>
    %74 = vector.shape_cast %73 : vector<1x32x32xbf16> to vector<32x32xbf16>
    %c1_57 = arith.constant 1 : index
    %c0_58 = arith.constant 0 : index
    %c0_59 = arith.constant 0 : index
    %75 = vector.load %arg9[%c1_57, %c0_58, %c0_59] : memref<2x1x32xf32, #tpu.memory_space<vmem>>, vector<1x1x32xf32>
    %76 = vector.shape_cast %75 : vector<1x1x32xf32> to vector<1x32xf32>
    %c1_60 = arith.constant 1 : index
    %c0_61 = arith.constant 0 : index
    %c0_62 = arith.constant 0 : index
    %77 = vector.load %arg10[%c1_60, %c0_61, %c0_62] : memref<2x32x32xbf16, #tpu.memory_space<vmem>>, vector<1x32x32xbf16>
    %78 = vector.shape_cast %77 : vector<1x32x32xbf16> to vector<32x32xbf16>
    %c1_63 = arith.constant 1 : index
    %c0_64 = arith.constant 0 : index
    %c0_65 = arith.constant 0 : index
    %79 = vector.load %arg11[%c1_63, %c0_64, %c0_65] : memref<2x1x32xf32, #tpu.memory_space<vmem>>, vector<1x1x32xf32>
    %80 = vector.shape_cast %79 : vector<1x1x32xf32> to vector<1x32xf32>
    %81 = arith.truncf %72 : vector<8x32xf32> to vector<8x32xbf16>
    %cst_66 = arith.constant dense<0.000000e+00> : vector<8x32xf32>
    %82 = tpu.matmul %81, %74, %cst_66 {dimension_numbers = #tpu.dot_dimension_numbers<[1], [0], [0], [1], [0, 0, 1, 1], [], []>} : vector<8x32xbf16>, vector<32x32xbf16>, vector<8x32xf32> -> vector<8x32xf32>
    %83 = vector.broadcast %76 : vector<1x32xf32> to vector<8x32xf32>
    %84 = arith.addf %82, %83 : vector<8x32xf32>
    %cst_67 = arith.constant 0.000000e+00 : f32
    %85 = vector.broadcast %cst_67 : f32 to vector<8x32xf32>
    %86 = arith.maximumf %84, %85 : vector<8x32xf32>
    %87 = arith.truncf %86 : vector<8x32xf32> to vector<8x32xbf16>
    %cst_68 = arith.constant dense<0.000000e+00> : vector<8x32xf32>
    %88 = tpu.matmul %87, %78, %cst_68 {dimension_numbers = #tpu.dot_dimension_numbers<[1], [0], [0], [1], [0, 0, 1, 1], [], []>} : vector<8x32xbf16>, vector<32x32xbf16>, vector<8x32xf32> -> vector<8x32xf32>
    %89 = vector.broadcast %80 : vector<1x32xf32> to vector<8x32xf32>
    %90 = arith.addf %88, %89 : vector<8x32xf32>
    %91 = arith.addf %90, %72 : vector<8x32xf32>
    %cst_69 = arith.constant 0.000000e+00 : f32
    %92 = vector.broadcast %cst_69 : f32 to vector<8x32xf32>
    %93 = arith.maximumf %91, %92 : vector<8x32xf32>
    %c0_70 = arith.constant 0 : index
    %c0_71 = arith.constant 0 : index
    %94 = vector.load %arg12[%c0_70, %c0_71] : memref<8x32xf32, #tpu.memory_space<vmem>>, vector<8x32xf32>
    tpu.vector_store %arg12[%c0_70, %c0_71], %93 {strides = array<i32>} : memref<8x32xf32, #tpu.memory_space<vmem>>, vector<8x32xf32>,
    return
  }
  func.func @transform_0(%arg0: i32) -> (i32, i32) {
    %c0_i32 = arith.constant 0 : i32
    %c0_i32_0 = arith.constant 0 : i32
    return %arg0, %c0_i32 : i32, i32
  }
  func.func @transform_1(%arg0: i32) -> (i32, i32) {
    %c0_i32 = arith.constant 0 : i32
    %c0_i32_0 = arith.constant 0 : i32
    %c0_i32_1 = arith.constant 0 : i32
    return %c0_i32, %c0_i32_0 : i32, i32
  }
  func.func @transform_2(%arg0: i32) -> (i32, i32) {
    %c0_i32 = arith.constant 0 : i32
    %c0_i32_0 = arith.constant 0 : i32
    %c0_i32_1 = arith.constant 0 : i32
    return %c0_i32, %c0_i32_0 : i32, i32
  }
  func.func @transform_3(%arg0: i32) -> (i32, i32, i32) {
    %c0_i32 = arith.constant 0 : i32
    %c0_i32_0 = arith.constant 0 : i32
    %c0_i32_1 = arith.constant 0 : i32
    %c0_i32_2 = arith.constant 0 : i32
    return %c0_i32, %c0_i32_0, %c0_i32_1 : i32, i32, i32
  }
  func.func @transform_4(%arg0: i32) -> (i32, i32, i32) {
    %c0_i32 = arith.constant 0 : i32
    %c0_i32_0 = arith.constant 0 : i32
    %c0_i32_1 = arith.constant 0 : i32
    %c0_i32_2 = arith.constant 0 : i32
    return %c0_i32, %c0_i32_0, %c0_i32_1 : i32, i32, i32
  }
  func.func @transform_5(%arg0: i32) -> (i32, i32, i32) {
    %c0_i32 = arith.constant 0 : i32
    %c0_i32_0 = arith.constant 0 : i32
    %c0_i32_1 = arith.constant 0 : i32
    %c0_i32_2 = arith.constant 0 : i32
    return %c0_i32, %c0_i32_0, %c0_i32_1 : i32, i32, i32
  }
  func.func @transform_6(%arg0: i32) -> (i32, i32, i32) {
    %c0_i32 = arith.constant 0 : i32
    %c0_i32_0 = arith.constant 0 : i32
    %c0_i32_1 = arith.constant 0 : i32
    %c0_i32_2 = arith.constant 0 : i32
    return %c0_i32, %c0_i32_0, %c0_i32_1 : i32, i32, i32
  }
  func.func @transform_7(%arg0: i32) -> (i32, i32, i32) {
    %c0_i32 = arith.constant 0 : i32
    %c0_i32_0 = arith.constant 0 : i32
    %c0_i32_1 = arith.constant 0 : i32
    %c0_i32_2 = arith.constant 0 : i32
    return %c0_i32, %c0_i32_0, %c0_i32_1 : i32, i32, i32
  }
  func.func @transform_8(%arg0: i32) -> (i32, i32, i32) {
    %c0_i32 = arith.constant 0 : i32
    %c0_i32_0 = arith.constant 0 : i32
    %c0_i32_1 = arith.constant 0 : i32
    %c0_i32_2 = arith.constant 0 : i32
    return %c0_i32, %c0_i32_0, %c0_i32_1 : i32, i32, i32
  }
  func.func @transform_9(%arg0: i32) -> (i32, i32, i32) {
    %c0_i32 = arith.constant 0 : i32
    %c0_i32_0 = arith.constant 0 : i32
    %c0_i32_1 = arith.constant 0 : i32
    %c0_i32_2 = arith.constant 0 : i32
    return %c0_i32, %c0_i32_0, %c0_i32_1 : i32, i32, i32
  }
  func.func @transform_10(%arg0: i32) -> (i32, i32, i32) {
    %c0_i32 = arith.constant 0 : i32
    %c0_i32_0 = arith.constant 0 : i32
    %c0_i32_1 = arith.constant 0 : i32
    %c0_i32_2 = arith.constant 0 : i32
    return %c0_i32, %c0_i32_0, %c0_i32_1 : i32, i32, i32
  }
  func.func @transform_11(%arg0: i32) -> (i32, i32) {
    %c0_i32 = arith.constant 0 : i32
    %c0_i32_0 = arith.constant 0 : i32
    return %arg0, %c0_i32 : i32, i32
  }
}

</mosaic_0001>

<llo_original>
// kernel: custom-call.8
$region0: #{custom-call.8}
  %s0 = inlined_call_operand.vmem [shape: f32[2,32], index: 0, kind: output, shape index: {}]

// kernel: neg.1
$region0: #{neg.1}
  #allocation0 [shape = 's32[1]{0}', space=sflag, size = 0x4, scoped, tag = 'scoped memory for neg.1']
  %s0 = inlined_call_operand.vmem [shape: f32[2,8,32], index: 0, kind: input, shape index: {}]
  %s1 = inlined_call_operand.vmem [shape: f32[2,8,32], index: 1, kind: output, shape index: {}]
  %v2 = vld [vmem:[%s0] sm:$0xff]
  %3 = xla_tuple %v2
  %4 = xla_tuple %3
  %v5 = vxor.u32 %v2, 2147483648
  %6 = xla_tuple %v5
  %7 = vst [vmem:[%s1] sm:$0xff] %v5
  %s8 = scalar_lea.vmem %s0, 8
  %v9 = vld [vmem:[%s8] sm:$0xff]
  %10 = xla_tuple %v9
  %11 = xla_tuple %10
  %v12 = vxor.u32 %v9, 2147483648
  %13 = xla_tuple %v12
  %s14 = scalar_lea.vmem %s1, 8
  %15 = vst [vmem:[%s14] sm:$0xff] %v12

// kernel: extraction_block_forward.1
$region0: #{extraction_block_forward.1}
  #allocation0 [shape = 'u32[]', space=smem, size = 0x4, offset = 0x4, fixed_abs, tag = 'smem constant byte address 0x4 - core index']
  #allocation1 [shape = 'u32[144,128]{1,0:T(1,128)}', space=vmem, size = 0x12000, scoped, tag = 'internal scratch']
  %s0 = inlined_call_operand.vmem [shape: bf16[128,32], index: 0, kind: input, shape index: {}]
  %s1 = inlined_call_operand.vmem [shape: bf16[32,32], index: 1, kind: input, shape index: {}]
  %s2 = inlined_call_operand.vmem [shape: f32[1,32], index: 2, kind: input, shape index: {}]
  %s3 = inlined_call_operand.vmem [shape: bf16[2,32,32], index: 3, kind: input, shape index: {}]
  %s4 = inlined_call_operand.vmem [shape: f32[2,1,32], index: 4, kind: input, shape index: {}]
  %s5 = inlined_call_operand.vmem [shape: bf16[2,32,32], index: 5, kind: input, shape index: {}]
  %s6 = inlined_call_operand.vmem [shape: f32[2,1,32], index: 6, kind: input, shape index: {}]
  %s7 = inlined_call_operand.vmem [shape: bf16[2,32,32], index: 7, kind: input, shape index: {}]
  %s8 = inlined_call_operand.vmem [shape: f32[2,1,32], index: 8, kind: input, shape index: {}]
  %s9 = inlined_call_operand.vmem [shape: bf16[2,32,32], index: 9, kind: input, shape index: {}]
  %s10 = inlined_call_operand.vmem [shape: f32[2,1,32], index: 10, kind: input, shape index: {}]
  %s11 = inlined_call_operand.hbm [shape: f32[16,32], index: 11, kind: output, shape index: {}]
  %s12 = sld [smem:[#allocation0]]
  $region77: #{extraction_block_forward.1} parent=0
    _
  %s14 = ssub.s32 1, %s12
  %s15 = scalar_select 0, %s14, %s12
  $region1: #{extraction_block_forward.1} parent=0
    #allocation2 [shape = 'u8[8192]{0}', space=vmem, size = 0x2000, scoped, tag = 'output window, operand 0']
    #allocation3 [shape = 's32[2]{0}', space=sflag, size = 0x8, scoped, tag = 'scoped memory for extraction_block_forward.1']
    %16 = vsyncpa [#allocation3], 0
    %s17 = scalar_lea.sflag [#allocation3], 1
    %18 = vsyncpa %s17, 0
    loop: start=0, step=1, limit=4
    $region2: #{extraction_block_forward.1} parent=1 // loop_pre_header
      _
    $region3: #{extraction_block_forward.1} parent=1 // loop_header
      %s20 = sphi 0, %s24
      %p21 = scmp.ge.s32.totalorder %s20, 4
      %s30 = sphi 0, %s32
      %s33 = sphi 0, %s30
      %s34 = sphi 0, %s33
      %s50 = sphi 0, %s34
      %s54 = sphi 0, %s54
      %s56 = sphi 0, %s54
      %s57 = sphi 0, %s56
      %s71 = sphi 0, %s57
      %s75 = sphi 0, %s75
      %s77 = sphi 0, %s75
      %s78 = sphi 0, %s77
      %s92 = sphi 0, %s78
      %s96 = sphi 0, %s96
      %s98 = sphi 0, %s96
      %s99 = sphi 0, %s98
      %s113 = sphi 0, %s99
      %s117 = sphi 0, %s117
      %s119 = sphi 0, %s117
      %s120 = sphi 0, %s119
      %s134 = sphi 0, %s120
      %s138 = sphi 0, %s138
      %s140 = sphi 0, %s138
      %s141 = sphi 0, %s140
      %s155 = sphi 0, %s141
      %s159 = sphi 0, %s159
      %s161 = sphi 0, %s159
      %s162 = sphi 0, %s161
      %s176 = sphi 0, %s162
      %s180 = sphi 0, %s180
      %s182 = sphi 0, %s180
      %s183 = sphi 0, %s182
      %s197 = sphi 0, %s183
      %s201 = sphi 0, %s201
      %s203 = sphi 0, %s201
      %s204 = sphi 0, %s203
      %s218 = sphi 0, %s204
      %s222 = sphi 0, %s222
      %s224 = sphi 0, %s222
      %s225 = sphi 0, %s224
      %s239 = sphi 0, %s225
      %s243 = sphi 0, %s243
      %s245 = sphi 0, %s243
      %s246 = sphi 0, %s245
      %s260 = sphi 0, %s246
      %s266 = sphi 0, %s268
      %s269 = sphi 0, %s266
      %s270 = sphi 0, %s269
      %s286 = sphi 0, %s270
    $region4: #{extraction_block_forward.1} parent=1 // loop_header_branch
      %23 = sbr.rel (%p21) target = $region8
    $region5: #{extraction_block_forward.1} parent=1 // loop_body
      %s25 = ssub.s32 %s20, 1
      %s26 = ssub.s32 %s20, 2
      %s27 = sadd.s32 %s20, 1
      %s28 = ssub.s32 %s20, %s27
      %p29 = scmp.eq.s32.totalorder %s28, 0
      %s31 = sadd.s32 %s30, 1
      %s32 = scalar_select %p29, %s30, %s31
      %p35 = pneg %p29
      %p36 = scmp.eq.s32.totalorder %s20, 1
      %p37 = por %p35, %p36
      %p38 = scmp.ne.s32.totalorder %s30, %s33
      %p39 = scmp.eq.s32.totalorder %s20, 0
      %p40 = por %p38, %p39
      %p41 = scmp.ne.s32.totalorder %s30, %s33
      %p42 = scmp.eq.s32.totalorder %s25, 1
      %p43 = por %p41, %p42
      %p44 = scmp.ne.s32.totalorder %s33, %s34
      %p45 = scmp.eq.s32.totalorder %s25, 0
      %p46 = por %p44, %p45
      %p47 = scmp.ne.s32.totalorder %s33, %s34
      %p48 = scmp.eq.s32.totalorder %s26, 1
      %p49 = por %p47, %p48
      %p51 = scmp.ne.s32.totalorder %s34, %s50
      %p52 = scmp.eq.s32.totalorder %s26, 0
      %p53 = por %p51, %p52
      %s55 = sadd.s32 %s54, 1
      %p58 = scmp.eq.s32.totalorder %s20, 1
      %p59 = scmp.ne.s32.totalorder %s54, %s56
      %p60 = scmp.eq.s32.totalorder %s20, 0
      %p61 = por %p59, %p60
      %p62 = scmp.ne.s32.totalorder %s54, %s56
      %p63 = scmp.eq.s32.totalorder %s25, 1
      %p64 = por %p62, %p63
      %p65 = scmp.ne.s32.totalorder %s56, %s57
      %p66 = scmp.eq.s32.totalorder %s25, 0
      %p67 = por %p65, %p66
      %p68 = scmp.ne.s32.totalorder %s56, %s57
      %p69 = scmp.eq.s32.totalorder %s26, 1
      %p70 = por %p68, %p69
      %p72 = scmp.ne.s32.totalorder %s57, %s71
      %p73 = scmp.eq.s32.totalorder %s26, 0
      %p74 = por %p72, %p73
      %s76 = sadd.s32 %s75, 1
      %p79 = scmp.eq.s32.totalorder %s20, 1
      %p80 = scmp.ne.s32.totalorder %s75, %s77
      %p81 = scmp.eq.s32.totalorder %s20, 0
      %p82 = por %p80, %p81
      %p83 = scmp.ne.s32.totalorder %s75, %s77
      %p84 = scmp.eq.s32.totalorder %s25, 1
      %p85 = por %p83, %p84
      %p86 = scmp.ne.s32.totalorder %s77, %s78
      %p87 = scmp.eq.s32.totalorder %s25, 0
      %p88 = por %p86, %p87
      %p89 = scmp.ne.s32.totalorder %s77, %s78
      %p90 = scmp.eq.s32.totalorder %s26, 1
      %p91 = por %p89, %p90
      %p93 = scmp.ne.s32.totalorder %s78, %s92
      %p94 = scmp.eq.s32.totalorder %s26, 0
      %p95 = por %p93, %p94
      %s97 = sadd.s32 %s96, 1
      %p100 = scmp.eq.s32.totalorder %s20, 1
      %p101 = scmp.ne.s32.totalorder %s96, %s98
      %p102 = scmp.eq.s32.totalorder %s20, 0
      %p103 = por %p101, %p102
      %p104 = scmp.ne.s32.totalorder %s96, %s98
      %p105 = scmp.eq.s32.totalorder %s25, 1
      %p106 = por %p104, %p105
      %p107 = scmp.ne.s32.totalorder %s98, %s99
      %p108 = scmp.eq.s32.totalorder %s25, 0
      %p109 = por %p107, %p108
      %p110 = scmp.ne.s32.totalorder %s98, %s99
      %p111 = scmp.eq.s32.totalorder %s26, 1
      %p112 = por %p110, %p111
      %p114 = scmp.ne.s32.totalorder %s99, %s113
      %p115 = scmp.eq.s32.totalorder %s26, 0
      %p116 = por %p114, %p115
      %s118 = sadd.s32 %s117, 1
      %p121 = scmp.eq.s32.totalorder %s20, 1
      %p122 = scmp.ne.s32.totalorder %s117, %s119
      %p123 = scmp.eq.s32.totalorder %s20, 0
      %p124 = por %p122, %p123
      %p125 = scmp.ne.s32.totalorder %s117, %s119
      %p126 = scmp.eq.s32.totalorder %s25, 1
      %p127 = por %p125, %p126
      %p128 = scmp.ne.s32.totalorder %s119, %s120
      %p129 = scmp.eq.s32.totalorder %s25, 0
      %p130 = por %p128, %p129
      %p131 = scmp.ne.s32.totalorder %s119, %s120
      %p132 = scmp.eq.s32.totalorder %s26, 1
      %p133 = por %p131, %p132
      %p135 = scmp.ne.s32.totalorder %s120, %s134
      %p136 = scmp.eq.s32.totalorder %s26, 0
      %p137 = por %p135, %p136
      %s139 = sadd.s32 %s138, 1
      %p142 = scmp.eq.s32.totalorder %s20, 1
      %p143 = scmp.ne.s32.totalorder %s138, %s140
      %p144 = scmp.eq.s32.totalorder %s20, 0
      %p145 = por %p143, %p144
      %p146 = scmp.ne.s32.totalorder %s138, %s140
      %p147 = scmp.eq.s32.totalorder %s25, 1
      %p148 = por %p146, %p147
      %p149 = scmp.ne.s32.totalorder %s140, %s141
      %p150 = scmp.eq.s32.totalorder %s25, 0
      %p151 = por %p149, %p150
      %p152 = scmp.ne.s32.totalorder %s140, %s141
      %p153 = scmp.eq.s32.totalorder %s26, 1
      %p154 = por %p152, %p153
      %p156 = scmp.ne.s32.totalorder %s141, %s155
      %p157 = scmp.eq.s32.totalorder %s26, 0
      %p158 = por %p156, %p157
      %s160 = sadd.s32 %s159, 1
      %p163 = scmp.eq.s32.totalorder %s20, 1
      %p164 = scmp.ne.s32.totalorder %s159, %s161
      %p165 = scmp.eq.s32.totalorder %s20, 0
      %p166 = por %p164, %p165
      %p167 = scmp.ne.s32.totalorder %s159, %s161
      %p168 = scmp.eq.s32.totalorder %s25, 1
      %p169 = por %p167, %p168
      %p170 = scmp.ne.s32.totalorder %s161, %s162
      %p171 = scmp.eq.s32.totalorder %s25, 0
      %p172 = por %p170, %p171
      %p173 = scmp.ne.s32.totalorder %s161, %s162
      %p174 = scmp.eq.s32.totalorder %s26, 1
      %p175 = por %p173, %p174
      %p177 = scmp.ne.s32.totalorder %s162, %s176
      %p178 = scmp.eq.s32.totalorder %s26, 0
      %p179 = por %p177, %p178
      %s181 = sadd.s32 %s180, 1
      %p184 = scmp.eq.s32.totalorder %s20, 1
      %p185 = scmp.ne.s32.totalorder %s180, %s182
      %p186 = scmp.eq.s32.totalorder %s20, 0
      %p187 = por %p185, %p186
      %p188 = scmp.ne.s32.totalorder %s180, %s182
      %p189 = scmp.eq.s32.totalorder %s25, 1
      %p190 = por %p188, %p189
      %p191 = scmp.ne.s32.totalorder %s182, %s183
      %p192 = scmp.eq.s32.totalorder %s25, 0
      %p193 = por %p191, %p192
      %p194 = scmp.ne.s32.totalorder %s182, %s183
      %p195 = scmp.eq.s32.totalorder %s26, 1
      %p196 = por %p194, %p195
      %p198 = scmp.ne.s32.totalorder %s183, %s197
      %p199 = scmp.eq.s32.totalorder %s26, 0
      %p200 = por %p198, %p199
      %s202 = sadd.s32 %s201, 1
      %p205 = scmp.eq.s32.totalorder %s20, 1
      %p206 = scmp.ne.s32.totalorder %s201, %s203
      %p207 = scmp.eq.s32.totalorder %s20, 0
      %p208 = por %p206, %p207
      %p209 = scmp.ne.s32.totalorder %s201, %s203
      %p210 = scmp.eq.s32.totalorder %s25, 1
      %p211 = por %p209, %p210
      %p212 = scmp.ne.s32.totalorder %s203, %s204
      %p213 = scmp.eq.s32.totalorder %s25, 0
      %p214 = por %p212, %p213
      %p215 = scmp.ne.s32.totalorder %s203, %s204
      %p216 = scmp.eq.s32.totalorder %s26, 1
      %p217 = por %p215, %p216
      %p219 = scmp.ne.s32.totalorder %s204, %s218
      %p220 = scmp.eq.s32.totalorder %s26, 0
      %p221 = por %p219, %p220
      %s223 = sadd.s32 %s222, 1
      %p226 = scmp.eq.s32.totalorder %s20, 1
      %p227 = scmp.ne.s32.totalorder %s222, %s224
      %p228 = scmp.eq.s32.totalorder %s20, 0
      %p229 = por %p227, %p228
      %p230 = scmp.ne.s32.totalorder %s222, %s224
      %p231 = scmp.eq.s32.totalorder %s25, 1
      %p232 = por %p230, %p231
      %p233 = scmp.ne.s32.totalorder %s224, %s225
      %p234 = scmp.eq.s32.totalorder %s25, 0
      %p235 = por %p233, %p234
      %p236 = scmp.ne.s32.totalorder %s224, %s225
      %p237 = scmp.eq.s32.totalorder %s26, 1
      %p238 = por %p236, %p237
      %p240 = scmp.ne.s32.totalorder %s225, %s239
      %p241 = scmp.eq.s32.totalorder %s26, 0
      %p242 = por %p240, %p241
      %s244 = sadd.s32 %s243, 1
      %p247 = scmp.eq.s32.totalorder %s20, 1
      %p248 = scmp.ne.s32.totalorder %s243, %s245
      %p249 = scmp.eq.s32.totalorder %s20, 0
      %p250 = por %p248, %p249
      %p251 = scmp.ne.s32.totalorder %s243, %s245
      %p252 = scmp.eq.s32.totalorder %s25, 1
      %p253 = por %p251, %p252
      %p254 = scmp.ne.s32.totalorder %s245, %s246
      %p255 = scmp.eq.s32.totalorder %s25, 0
      %p256 = por %p254, %p255
      %p257 = scmp.ne.s32.totalorder %s245, %s246
      %p258 = scmp.eq.s32.totalorder %s26, 1
      %p259 = por %p257, %p258
      %p261 = scmp.ne.s32.totalorder %s246, %s260
      %p262 = scmp.eq.s32.totalorder %s26, 0
      %p263 = por %p261, %p262
      %s264 = ssub.s32 %s20, %s27
      %p265 = scmp.eq.s32.totalorder %s264, 0
      %s267 = sadd.s32 %s266, 1
      %s268 = scalar_select %p265, %s266, %s267
      %p271 = pneg %p265
      %p272 = scmp.eq.s32.totalorder %s20, 1
      %p273 = por %p271, %p272
      %p274 = scmp.ne.s32.totalorder %s266, %s269
      %p275 = scmp.eq.s32.totalorder %s20, 0
      %p276 = por %p274, %p275
      %p277 = scmp.ne.s32.totalorder %s266, %s269
      %p278 = scmp.eq.s32.totalorder %s25, 1
      %p279 = por %p277, %p278
      %p280 = scmp.ne.s32.totalorder %s269, %s270
      %p281 = scmp.eq.s32.totalorder %s25, 0
      %p282 = por %p280, %p281
      %p283 = scmp.ne.s32.totalorder %s269, %s270
      %p284 = scmp.eq.s32.totalorder %s26, 1
      %p285 = por %p283, %p284
      %p287 = scmp.ne.s32.totalorder %s270, %s286
      %p288 = scmp.eq.s32.totalorder %s26, 0
      %p289 = por %p287, %p288
      %p290 = scmp.le.s32.totalorder 1, %s20
      %p291 = scmp.lt.s32.totalorder %s20, 3
      %p292 = pnand %p290, %p291
      %p293 = pneg %p292
      // Predicated region
      $region9: #{extraction_block_forward.1} parent=5 // pred_check
        _
      $region10: #{extraction_block_forward.1} parent=5 // pred_check_branch
        %295 = sbr.rel (%p292) target = $region12
      $region11: #{extraction_block_forward.1} parent=5 // pred_region
        %s296 = ssub.s32 %s20, 1
        // Predicated region
        $region13: #{extraction_block_forward.1} parent=11 // pred_check
          %p297 = pneg %p67
        $region14: #{extraction_block_forward.1} parent=11 // pred_check_branch
          %299 = sbr.rel (%p297) target = $region16
        $region15: #{extraction_block_forward.1} parent=11 // pred_region
          _
        $region16: #{extraction_block_forward.1} parent=11 // pred_fallthru
          _
        // Predicated region
        $region17: #{extraction_block_forward.1} parent=11 // pred_check
          %p300 = pneg %p88
        $region18: #{extraction_block_forward.1} parent=11 // pred_check_branch
          %302 = sbr.rel (%p300) target = $region20
        $region19: #{extraction_block_forward.1} parent=11 // pred_region
          _
        $region20: #{extraction_block_forward.1} parent=11 // pred_fallthru
          _
        // Predicated region
        $region21: #{extraction_block_forward.1} parent=11 // pred_check
          %p303 = pneg %p109
        $region22: #{extraction_block_forward.1} parent=11 // pred_check_branch
          %305 = sbr.rel (%p303) target = $region24
        $region23: #{extraction_block_forward.1} parent=11 // pred_region
          _
        $region24: #{extraction_block_forward.1} parent=11 // pred_fallthru
          _
        // Predicated region
        $region25: #{extraction_block_forward.1} parent=11 // pred_check
          %p306 = pneg %p130
        $region26: #{extraction_block_forward.1} parent=11 // pred_check_branch
          %308 = sbr.rel (%p306) target = $region28
        $region27: #{extraction_block_forward.1} parent=11 // pred_region
          _
        $region28: #{extraction_block_forward.1} parent=11 // pred_fallthru
          _
        // Predicated region
        $region29: #{extraction_block_forward.1} parent=11 // pred_check
          %p309 = pneg %p151
        $region30: #{extraction_block_forward.1} parent=11 // pred_check_branch
          %311 = sbr.rel (%p309) target = $region32
        $region31: #{extraction_block_forward.1} parent=11 // pred_region
          _
        $region32: #{extraction_block_forward.1} parent=11 // pred_fallthru
          _
        // Predicated region
        $region33: #{extraction_block_forward.1} parent=11 // pred_check
          %p312 = pneg %p172
        $region34: #{extraction_block_forward.1} parent=11 // pred_check_branch
          %314 = sbr.rel (%p312) target = $region36
        $region35: #{extraction_block_forward.1} parent=11 // pred_region
          _
        $region36: #{extraction_block_forward.1} parent=11 // pred_fallthru
          _
        // Predicated region
        $region37: #{extraction_block_forward.1} parent=11 // pred_check
          %p315 = pneg %p193
        $region38: #{extraction_block_forward.1} parent=11 // pred_check_branch
          %317 = sbr.rel (%p315) target = $region40
        $region39: #{extraction_block_forward.1} parent=11 // pred_region
          _
        $region40: #{extraction_block_forward.1} parent=11 // pred_fallthru
          _
        // Predicated region
        $region41: #{extraction_block_forward.1} parent=11 // pred_check
          %p318 = pneg %p214
        $region42: #{extraction_block_forward.1} parent=11 // pred_check_branch
          %320 = sbr.rel (%p318) target = $region44
        $region43: #{extraction_block_forward.1} parent=11 // pred_region
          _
        $region44: #{extraction_block_forward.1} parent=11 // pred_fallthru
          _
        // Predicated region
        $region45: #{extraction_block_forward.1} parent=11 // pred_check
          %p321 = pneg %p235
        $region46: #{extraction_block_forward.1} parent=11 // pred_check_branch
          %323 = sbr.rel (%p321) target = $region48
        $region47: #{extraction_block_forward.1} parent=11 // pred_region
          _
        $region48: #{extraction_block_forward.1} parent=11 // pred_fallthru
          _
        // Predicated region
        $region49: #{extraction_block_forward.1} parent=11 // pred_check
          %p324 = pneg %p256
        $region50: #{extraction_block_forward.1} parent=11 // pred_check_branch
          %326 = sbr.rel (%p324) target = $region52
        $region51: #{extraction_block_forward.1} parent=11 // pred_region
          _
        $region52: #{extraction_block_forward.1} parent=11 // pred_fallthru
          _
      $region12: #{extraction_block_forward.1} parent=5 // pred_fallthru
        _
      %p327 = scmp.lt.s32.totalorder %s20, 2
      // Predicated region
      $region53: #{extraction_block_forward.1} parent=5 // pred_check
        %p328 = pneg %p327
      $region54: #{extraction_block_forward.1} parent=5 // pred_check_branch
        %330 = sbr.rel (%p328) target = $region56
      $region55: #{extraction_block_forward.1} parent=5 // pred_region
        // Predicated region
        $region57: #{extraction_block_forward.1} parent=55 // pred_check
          %p331 = pneg %p40
        $region58: #{extraction_block_forward.1} parent=55 // pred_check_branch
          %333 = sbr.rel (%p331) target = $region60
        $region59: #{extraction_block_forward.1} parent=55 // pred_region
          %s334 = smul.u32 8, %s20
          %p335 = scmp.lt.s32.totalorder %s334, 15
          %s336 = scalar_select %p335, %s334, 15
          %s337 = smul.addr %s336, 4
          %s338 = scalar_lea.vmem %s0, %s337
          %s339 = smul.u32 8, %s20
        $region60: #{extraction_block_forward.1} parent=55 // pred_fallthru
          _
      $region56: #{extraction_block_forward.1} parent=5 // pred_fallthru
        _
      %p340 = scmp.le.s32.totalorder 1, %s20
      %p341 = scmp.lt.s32.totalorder %s20, 3
      %p342 = pnand %p340, %p341
      %p343 = pneg %p342
      // Predicated region
      $region61: #{extraction_block_forward.1} parent=5 // pred_check
        _
      $region62: #{extraction_block_forward.1} parent=5 // pred_check_branch
        %345 = sbr.rel (%p342) target = $region64
      $region63: #{extraction_block_forward.1} parent=5 // pred_region
        %s346 = ssub.s32 %s20, 1
        %s347 = smul.u32 8, %s25
        %p348 = scmp.lt.s32.totalorder %s347, 15
        %s349 = scalar_select %p348, %s347, 15
        %s350 = smul.addr %s349, 4
        %s351 = scalar_lea.vmem %s0, %s350
        %p352 = pneg %p46
        %p353 = pneg %p43
        %p354 = pneg %p67
        %p355 = pneg %p64
        %p356 = pneg %p88
        %p357 = pneg %p85
        %p358 = pneg %p109
        %p359 = pneg %p106
        %p360 = pneg %p130
        %p361 = pneg %p127
        %p362 = pneg %p151
        %p363 = pneg %p148
        %p364 = pneg %p172
        %p365 = pneg %p169
        %p366 = pneg %p193
        %p367 = pneg %p190
        %p368 = pneg %p214
        %p369 = pneg %p211
        %p370 = pneg %p235
        %p371 = pneg %p232
        %p372 = pneg %p256
        %p373 = pneg %p253
        %p374 = pneg %p282
        %p375 = pneg %p279
        %s376 = sand.u32 %s269, 1
        %s377 = scalar_lea.sflag [#allocation3], %s376
        %s378 = sand.u32 %s269, 1
        %s379 = smul.addr %s378, 8
        %s380 = scalar_lea.vmem [#allocation2], %s379
        %s381 = smul.u32 8, %s25
        %p382 = scmp.lt.s32.totalorder %s381, 15
        %s383 = scalar_select %p382, %s381, 15
        %s384 = smul.addr %s383, 4
        %s385 = scalar_lea.vmem %s0, %s384
        %s386 = smul.u32 8, %s25
        %v388 = vld [vmem:[%s385] sm:$0xf]
        %v389 = vld [vmem:[%s385 + $0x4] sm:$0xf]
        %v390 = vld [vmem:[%s385 + $0x8] sm:$0xf]
        %v391 = vld [vmem:[%s385 + $0xc] sm:$0xf]
        %v392 = vld [vmem:[%s385 + $0x10] sm:$0xf]
        %v393 = vld [vmem:[%s385 + $0x14] sm:$0xf]
        %v394 = vld [vmem:[%s385 + $0x18] sm:$0xf]
        %v395 = vld [vmem:[%s385 + $0x1c] sm:$0xf]
        %v396 = vld [vmem:[%s1] sm:$0xf]
        %v397 = vld [vmem:[%s1 + $0x4] sm:$0xf]
        %v398 = vld [vmem:[%s1 + $0x8] sm:$0xf]
        %v399 = vld [vmem:[%s1 + $0xc] sm:$0xf]
        %v400 = vld [vmem:[%s2] sm:$0x1]
        %v402 = vlaneseq
        %v403 = vshrl.u32 %v402, 7
        %v404 = vsub.s32 0, %v403
        %v405 = vrot.slane %v400, %v404
        %v415 = vunpack.c.l.b16 %v388
        %v416 = vunpack.c.l.b16 %v389
        %v417 = vunpack.c.l.b16 %v390
        %v418 = vunpack.c.l.b16 %v391
        %v419 = vunpack.c.l.b16 %v392
        %v420 = vunpack.c.l.b16 %v393
        %v421 = vunpack.c.l.b16 %v394
        %v422 = vunpack.c.l.b16 %v395
        %v423 = vpack.c.b16 %v416, %v415
        %v424 = vpack.c.b16 %v418, %v417
        %v425 = vpack.c.b16 %v420, %v419
        %v426 = vpack.c.b16 %v422, %v421
        %v431 = vunpack.c.l.b16 %v396
        %v432 = vunpack.c.l.b16 %v397
        %v433 = vunpack.c.l.b16 %v398
        %v434 = vunpack.c.l.b16 %v399
        %v435 = vpack.c.b16 %v432, %v431
        %v436 = vpack.c.b16 %v434, %v433
        %vm439 = vcmask 261120
        %v441 = vsel %vm439, %v423, 0
        %v444 = vsel %vm439, %v424, 0
        %v447 = vsel %vm439, %v425, 0
        %v450 = vsel %vm439, %v426, 0
        %452 = vmatprep.subr.bf16.mxu0 0
        %453 = vmatpush1.bf16.msra.mxu0 0
        %454 = vmatprep.subr.bf16.mxu0 0
        %455 = vmatpush1.bf16.msra.mxu0 0
        %456 = vmatprep.subr.bf16.mxu0 0
        %457 = vmatpush1.bf16.msra.mxu0 0
        %458 = vmatprep.subr.bf16.mxu0 0
        %459 = vmatpush1.bf16.msra.mxu0 0
        %460 = vmatprep.subr.bf16.mxu0 0
        %461 = vmatpush1.bf16.msra.mxu0 0
        %462 = vmatprep.subr.bf16.mxu0 0
        %463 = vmatpush1.bf16.msra.mxu0 0
        %464 = vmatprep.subr.bf16.mxu0 0
        %465 = vmatpush1.bf16.msra.mxu0 %v436
        %466 = vmatprep.subr.bf16.mxu0 0
        %467 = vmatpush1.bf16.msra.mxu0 %v435
        %468 = vmatprep.subr.bf16.mxu0 0
        %469 = vmatpush2.bf16.msra.mxu0 0
        %470 = vmatprep.subr.bf16.mxu0 0
        %471 = vmatpush2.bf16.msra.mxu0 0
        %472 = vmatprep.subr.bf16.mxu0 0
        %473 = vmatpush2.bf16.msra.mxu0 0
        %474 = vmatprep.subr.bf16.mxu0 0
        %475 = vmatpush2.bf16.msra.mxu0 0
        %476 = vmatprep.subr.bf16.mxu0 0
        %477 = vmatpush2.bf16.msra.mxu0 0
        %478 = vmatprep.subr.bf16.mxu0 0
        %479 = vmatpush2.bf16.msra.mxu0 0
        %480 = vmatprep.subr.bf16.mxu0 0
        %481 = vmatpush2.bf16.msra.mxu0 0
        %482 = vmatprep.subr.bf16.mxu0 0
        %483 = vmatpush2.bf16.msra.mxu0 0
        %484 = vmatprep.mubr.bf16.mxu0 0
        %485 = vmatmul.mubr.bf16.gmra.mxu0 %v441
        %v486 = vpop.f32.mrf.mxu0
        %v487 = vadd.f32 %v405, %v486
        %v488 = vpop.f32.mrf.mxu0
        %v489 = vpop.f32.mrf.mxu0
        %v490 = vadd.f32 %v405, %v489
        %v491 = vpop.f32.mrf.mxu0
        %492 = vmatprep.mubr.bf16.mxu0 0
        %493 = vmatmul.mubr.bf16.gmra.mxu0 %v444
        %v494 = vpop.f32.mrf.mxu0
        %v495 = vadd.f32 %v405, %v494
        %v496 = vpop.f32.mrf.mxu0
        %v497 = vpop.f32.mrf.mxu0
        %v498 = vadd.f32 %v405, %v497
        %v499 = vpop.f32.mrf.mxu0
        %500 = vmatprep.mubr.bf16.mxu0 0
        %501 = vmatmul.mubr.bf16.gmra.mxu0 %v447
        %v502 = vpop.f32.mrf.mxu0
        %v503 = vadd.f32 %v405, %v502
        %v504 = vpop.f32.mrf.mxu0
        %v505 = vpop.f32.mrf.mxu0
        %v506 = vadd.f32 %v405, %v505
        %v507 = vpop.f32.mrf.mxu0
        %508 = vmatprep.mubr.bf16.mxu0 0
        %509 = vmatmul.mubr.bf16.gmra.mxu0 %v450
        %v510 = vpop.f32.mrf.mxu0
        %v511 = vadd.f32 %v405, %v510
        %v512 = vpop.f32.mrf.mxu0
        %v513 = vpop.f32.mrf.mxu0
        %v514 = vadd.f32 %v405, %v513
        %v515 = vpop.f32.mrf.mxu0
        %516 = vdwg.mxu0
        %v517 = vmax.f32 %v487, 0.0
        %v518 = vmax.f32 %v490, 0.0
        %v519 = vmax.f32 %v495, 0.0
        %v520 = vmax.f32 %v498, 0.0
        %v521 = vmax.f32 %v503, 0.0
        %v522 = vmax.f32 %v506, 0.0
        %v523 = vmax.f32 %v511, 0.0
        %v524 = vmax.f32 %v514, 0.0
        %v525 = vld [vmem:[%s3] sm:$0xf]
        %v526 = vld [vmem:[%s3 + $0x4] sm:$0xf]
        %v527 = vld [vmem:[%s3 + $0x8] sm:$0xf]
        %v528 = vld [vmem:[%s3 + $0xc] sm:$0xf]
        %v529 = vld [vmem:[%s4] sm:$0x1]
        %v530 = vld [vmem:[%s5] sm:$0xf]
        %v531 = vld [vmem:[%s5 + $0x4] sm:$0xf]
        %v532 = vld [vmem:[%s5 + $0x8] sm:$0xf]
        %v533 = vld [vmem:[%s5 + $0xc] sm:$0xf]
        %v534 = vld [vmem:[%s6] sm:$0x1]
        %v535 = vpack.c.bf16 %v518, %v517
        %v536 = vpack.c.bf16 %v520, %v519
        %v537 = vpack.c.bf16 %v522, %v521
        %v538 = vpack.c.bf16 %v524, %v523
        %v540 = vlaneseq
        %v541 = vshrl.u32 %v540, 7
        %v542 = vsub.s32 0, %v541
        %v543 = vrot.slane %v529, %v542
        %v549 = vunpack.c.l.b16 %v525
        %v550 = vunpack.c.l.b16 %v526
        %v551 = vunpack.c.l.b16 %v527
        %v552 = vunpack.c.l.b16 %v528
        %v553 = vpack.c.b16 %v550, %v549
        %v554 = vpack.c.b16 %v552, %v551
        %v558 = vsel %vm439, %v535, 0
        %v561 = vsel %vm439, %v536, 0
        %v564 = vsel %vm439, %v537, 0
        %v567 = vsel %vm439, %v538, 0
        %569 = vmatprep.subr.bf16.mxu0 0
        %570 = vmatpush1.bf16.msra.mxu0 0
        %571 = vmatprep.subr.bf16.mxu0 0
        %572 = vmatpush1.bf16.msra.mxu0 0
        %573 = vmatprep.subr.bf16.mxu0 0
        %574 = vmatpush1.bf16.msra.mxu0 0
        %575 = vmatprep.subr.bf16.mxu0 0
        %576 = vmatpush1.bf16.msra.mxu0 0
        %577 = vmatprep.subr.bf16.mxu0 0
        %578 = vmatpush1.bf16.msra.mxu0 0
        %579 = vmatprep.subr.bf16.mxu0 0
        %580 = vmatpush1.bf16.msra.mxu0 0
        %581 = vmatprep.subr.bf16.mxu0 0
        %582 = vmatpush1.bf16.msra.mxu0 %v554
        %583 = vmatprep.subr.bf16.mxu0 0
        %584 = vmatpush1.bf16.msra.mxu0 %v553
        %585 = vmatprep.subr.bf16.mxu0 0
        %586 = vmatpush2.bf16.msra.mxu0 0
        %587 = vmatprep.subr.bf16.mxu0 0
        %588 = vmatpush2.bf16.msra.mxu0 0
        %589 = vmatprep.subr.bf16.mxu0 0
        %590 = vmatpush2.bf16.msra.mxu0 0
        %591 = vmatprep.subr.bf16.mxu0 0
        %592 = vmatpush2.bf16.msra.mxu0 0
        %593 = vmatprep.subr.bf16.mxu0 0
        %594 = vmatpush2.bf16.msra.mxu0 0
        %595 = vmatprep.subr.bf16.mxu0 0
        %596 = vmatpush2.bf16.msra.mxu0 0
        %597 = vmatprep.subr.bf16.mxu0 0
        %598 = vmatpush2.bf16.msra.mxu0 0
        %599 = vmatprep.subr.bf16.mxu0 0
        %600 = vmatpush2.bf16.msra.mxu0 0
        %601 = vmatprep.mubr.bf16.mxu0 0
        %602 = vmatmul.mubr.bf16.gmra.mxu0 %v558
        %v603 = vpop.f32.mrf.mxu0
        %v604 = vadd.f32 %v543, %v603
        %v605 = vpop.f32.mrf.mxu0
        %v606 = vpop.f32.mrf.mxu0
        %v607 = vadd.f32 %v543, %v606
        %v608 = vpop.f32.mrf.mxu0
        %609 = vmatprep.mubr.bf16.mxu0 0
        %610 = vmatmul.mubr.bf16.gmra.mxu0 %v561
        %v611 = vpop.f32.mrf.mxu0
        %v612 = vadd.f32 %v543, %v611
        %v613 = vpop.f32.mrf.mxu0
        %v614 = vpop.f32.mrf.mxu0
        %v615 = vadd.f32 %v543, %v614
        %v616 = vpop.f32.mrf.mxu0
        %617 = vmatprep.mubr.bf16.mxu0 0
        %618 = vmatmul.mubr.bf16.gmra.mxu0 %v564
        %v619 = vpop.f32.mrf.mxu0
        %v620 = vadd.f32 %v543, %v619
        %v621 = vpop.f32.mrf.mxu0
        %v622 = vpop.f32.mrf.mxu0
        %v623 = vadd.f32 %v543, %v622
        %v624 = vpop.f32.mrf.mxu0
        %625 = vmatprep.mubr.bf16.mxu0 0
        %626 = vmatmul.mubr.bf16.gmra.mxu0 %v567
        %v627 = vpop.f32.mrf.mxu0
        %v628 = vadd.f32 %v543, %v627
        %v629 = vpop.f32.mrf.mxu0
        %v630 = vpop.f32.mrf.mxu0
        %v631 = vadd.f32 %v543, %v630
        %v632 = vpop.f32.mrf.mxu0
        %633 = vdwg.mxu0
        %v634 = vmax.f32 %v604, 0.0
        %v635 = vmax.f32 %v607, 0.0
        %v636 = vmax.f32 %v612, 0.0
        %v637 = vmax.f32 %v615, 0.0
        %v638 = vmax.f32 %v620, 0.0
        %v639 = vmax.f32 %v623, 0.0
        %v640 = vmax.f32 %v628, 0.0
        %v641 = vmax.f32 %v631, 0.0
        %v642 = vpack.c.bf16 %v635, %v634
        %v643 = vpack.c.bf16 %v637, %v636
        %v644 = vpack.c.bf16 %v639, %v638
        %v645 = vpack.c.bf16 %v641, %v640
        %v647 = vlaneseq
        %v648 = vshrl.u32 %v647, 7
        %v649 = vsub.s32 0, %v648
        %v650 = vrot.slane %v534, %v649
        %v656 = vunpack.c.l.b16 %v530
        %v657 = vunpack.c.l.b16 %v531
        %v658 = vunpack.c.l.b16 %v532
        %v659 = vunpack.c.l.b16 %v533
        %v660 = vpack.c.b16 %v657, %v656
        %v661 = vpack.c.b16 %v659, %v658
        %v665 = vsel %vm439, %v642, 0
        %v668 = vsel %vm439, %v643, 0
        %v671 = vsel %vm439, %v644, 0
        %v674 = vsel %vm439, %v645, 0
        %676 = vmatprep.subr.bf16.mxu0 0
        %677 = vmatpush1.bf16.msra.mxu0 0
        %678 = vmatprep.subr.bf16.mxu0 0
        %679 = vmatpush1.bf16.msra.mxu0 0
        %680 = vmatprep.subr.bf16.mxu0 0
        %681 = vmatpush1.bf16.msra.mxu0 0
        %682 = vmatprep.subr.bf16.mxu0 0
        %683 = vmatpush1.bf16.msra.mxu0 0
        %684 = vmatprep.subr.bf16.mxu0 0
        %685 = vmatpush1.bf16.msra.mxu0 0
        %686 = vmatprep.subr.bf16.mxu0 0
        %687 = vmatpush1.bf16.msra.mxu0 0
        %688 = vmatprep.subr.bf16.mxu0 0
        %689 = vmatpush1.bf16.msra.mxu0 %v661
        %690 = vmatprep.subr.bf16.mxu0 0
        %691 = vmatpush1.bf16.msra.mxu0 %v660
        %692 = vmatprep.subr.bf16.mxu0 0
        %693 = vmatpush2.bf16.msra.mxu0 0
        %694 = vmatprep.subr.bf16.mxu0 0
        %695 = vmatpush2.bf16.msra.mxu0 0
        %696 = vmatprep.subr.bf16.mxu0 0
        %697 = vmatpush2.bf16.msra.mxu0 0
        %698 = vmatprep.subr.bf16.mxu0 0
        %699 = vmatpush2.bf16.msra.mxu0 0
        %700 = vmatprep.subr.bf16.mxu0 0
        %701 = vmatpush2.bf16.msra.mxu0 0
        %702 = vmatprep.subr.bf16.mxu0 0
        %703 = vmatpush2.bf16.msra.mxu0 0
        %704 = vmatprep.subr.bf16.mxu0 0
        %705 = vmatpush2.bf16.msra.mxu0 0
        %706 = vmatprep.subr.bf16.mxu0 0
        %707 = vmatpush2.bf16.msra.mxu0 0
        %708 = vmatprep.mubr.bf16.mxu0 0
        %709 = vmatmul.mubr.bf16.gmra.mxu0 %v665
        %v710 = vpop.f32.mrf.mxu0
        %v711 = vadd.f32 %v650, %v710
        %v712 = vpop.f32.mrf.mxu0
        %v713 = vpop.f32.mrf.mxu0
        %v714 = vadd.f32 %v650, %v713
        %v715 = vpop.f32.mrf.mxu0
        %716 = vmatprep.mubr.bf16.mxu0 0
        %717 = vmatmul.mubr.bf16.gmra.mxu0 %v668
        %v718 = vpop.f32.mrf.mxu0
        %v719 = vadd.f32 %v650, %v718
        %v720 = vpop.f32.mrf.mxu0
        %v721 = vpop.f32.mrf.mxu0
        %v722 = vadd.f32 %v650, %v721
        %v723 = vpop.f32.mrf.mxu0
        %724 = vmatprep.mubr.bf16.mxu0 0
        %725 = vmatmul.mubr.bf16.gmra.mxu0 %v671
        %v726 = vpop.f32.mrf.mxu0
        %v727 = vadd.f32 %v650, %v726
        %v728 = vpop.f32.mrf.mxu0
        %v729 = vpop.f32.mrf.mxu0
        %v730 = vadd.f32 %v650, %v729
        %v731 = vpop.f32.mrf.mxu0
        %732 = vmatprep.mubr.bf16.mxu0 0
        %733 = vmatmul.mubr.bf16.gmra.mxu0 %v674
        %v734 = vpop.f32.mrf.mxu0
        %v735 = vadd.f32 %v650, %v734
        %v736 = vpop.f32.mrf.mxu0
        %v737 = vpop.f32.mrf.mxu0
        %v738 = vadd.f32 %v650, %v737
        %v739 = vpop.f32.mrf.mxu0
        %740 = vdwg.mxu0
        %v741 = vadd.f32 %v711, %v517
        %v742 = vadd.f32 %v714, %v518
        %v743 = vadd.f32 %v719, %v519
        %v744 = vadd.f32 %v722, %v520
        %v745 = vadd.f32 %v727, %v521
        %v746 = vadd.f32 %v730, %v522
        %v747 = vadd.f32 %v735, %v523
        %v748 = vadd.f32 %v738, %v524
        %v749 = vmax.f32 %v741, 0.0
        %v750 = vmax.f32 %v742, 0.0
        %v751 = vmax.f32 %v743, 0.0
        %v752 = vmax.f32 %v744, 0.0
        %v753 = vmax.f32 %v745, 0.0
        %v754 = vmax.f32 %v746, 0.0
        %v755 = vmax.f32 %v747, 0.0
        %v756 = vmax.f32 %v748, 0.0
        %s757 = scalar_lea.vmem %s3, 16
        %v758 = vld [vmem:[%s757] sm:$0xf]
        %v759 = vld [vmem:[%s757 + $0x4] sm:$0xf]
        %v760 = vld [vmem:[%s757 + $0x8] sm:$0xf]
        %v761 = vld [vmem:[%s757 + $0xc] sm:$0xf]
        %s762 = scalar_lea.vmem %s4, 1
        %v763 = vld [vmem:[%s762] sm:$0x1]
        %s764 = scalar_lea.vmem %s5, 16
        %v765 = vld [vmem:[%s764] sm:$0xf]
        %v766 = vld [vmem:[%s764 + $0x4] sm:$0xf]
        %v767 = vld [vmem:[%s764 + $0x8] sm:$0xf]
        %v768 = vld [vmem:[%s764 + $0xc] sm:$0xf]
        %s769 = scalar_lea.vmem %s6, 1
        %v770 = vld [vmem:[%s769] sm:$0x1]
        %v771 = vpack.c.bf16 %v750, %v749
        %v772 = vpack.c.bf16 %v752, %v751
        %v773 = vpack.c.bf16 %v754, %v753
        %v774 = vpack.c.bf16 %v756, %v755
        %v776 = vlaneseq
        %v777 = vshrl.u32 %v776, 7
        %v778 = vsub.s32 0, %v777
        %v779 = vrot.slane %v763, %v778
        %v785 = vunpack.c.l.b16 %v758
        %v786 = vunpack.c.l.b16 %v759
        %v787 = vunpack.c.l.b16 %v760
        %v788 = vunpack.c.l.b16 %v761
        %v789 = vpack.c.b16 %v786, %v785
        %v790 = vpack.c.b16 %v788, %v787
        %v794 = vsel %vm439, %v771, 0
        %v797 = vsel %vm439, %v772, 0
        %v800 = vsel %vm439, %v773, 0
        %v803 = vsel %vm439, %v774, 0
        %805 = vmatprep.subr.bf16.mxu0 0
        %806 = vmatpush1.bf16.msra.mxu0 0
        %807 = vmatprep.subr.bf16.mxu0 0
        %808 = vmatpush1.bf16.msra.mxu0 0
        %809 = vmatprep.subr.bf16.mxu0 0
        %810 = vmatpush1.bf16.msra.mxu0 0
        %811 = vmatprep.subr.bf16.mxu0 0
        %812 = vmatpush1.bf16.msra.mxu0 0
        %813 = vmatprep.subr.bf16.mxu0 0
        %814 = vmatpush1.bf16.msra.mxu0 0
        %815 = vmatprep.subr.bf16.mxu0 0
        %816 = vmatpush1.bf16.msra.mxu0 0
        %817 = vmatprep.subr.bf16.mxu0 0
        %818 = vmatpush1.bf16.msra.mxu0 %v790
        %819 = vmatprep.subr.bf16.mxu0 0
        %820 = vmatpush1.bf16.msra.mxu0 %v789
        %821 = vmatprep.subr.bf16.mxu0 0
        %822 = vmatpush2.bf16.msra.mxu0 0
        %823 = vmatprep.subr.bf16.mxu0 0
        %824 = vmatpush2.bf16.msra.mxu0 0
        %825 = vmatprep.subr.bf16.mxu0 0
        %826 = vmatpush2.bf16.msra.mxu0 0
        %827 = vmatprep.subr.bf16.mxu0 0
        %828 = vmatpush2.bf16.msra.mxu0 0
        %829 = vmatprep.subr.bf16.mxu0 0
        %830 = vmatpush2.bf16.msra.mxu0 0
        %831 = vmatprep.subr.bf16.mxu0 0
        %832 = vmatpush2.bf16.msra.mxu0 0
        %833 = vmatprep.subr.bf16.mxu0 0
        %834 = vmatpush2.bf16.msra.mxu0 0
        %835 = vmatprep.subr.bf16.mxu0 0
        %836 = vmatpush2.bf16.msra.mxu0 0
        %837 = vmatprep.mubr.bf16.mxu0 0
        %838 = vmatmul.mubr.bf16.gmra.mxu0 %v794
        %v839 = vpop.f32.mrf.mxu0
        %v840 = vadd.f32 %v779, %v839
        %v841 = vpop.f32.mrf.mxu0
        %v842 = vpop.f32.mrf.mxu0
        %v843 = vadd.f32 %v779, %v842
        %v844 = vpop.f32.mrf.mxu0
        %845 = vmatprep.mubr.bf16.mxu0 0
        %846 = vmatmul.mubr.bf16.gmra.mxu0 %v797
        %v847 = vpop.f32.mrf.mxu0
        %v848 = vadd.f32 %v779, %v847
        %v849 = vpop.f32.mrf.mxu0
        %v850 = vpop.f32.mrf.mxu0
        %v851 = vadd.f32 %v779, %v850
        %v852 = vpop.f32.mrf.mxu0
        %853 = vmatprep.mubr.bf16.mxu0 0
        %854 = vmatmul.mubr.bf16.gmra.mxu0 %v800
        %v855 = vpop.f32.mrf.mxu0
        %v856 = vadd.f32 %v779, %v855
        %v857 = vpop.f32.mrf.mxu0
        %v858 = vpop.f32.mrf.mxu0
        %v859 = vadd.f32 %v779, %v858
        %v860 = vpop.f32.mrf.mxu0
        %861 = vmatprep.mubr.bf16.mxu0 0
        %862 = vmatmul.mubr.bf16.gmra.mxu0 %v803
        %v863 = vpop.f32.mrf.mxu0
        %v864 = vadd.f32 %v779, %v863
        %v865 = vpop.f32.mrf.mxu0
        %v866 = vpop.f32.mrf.mxu0
        %v867 = vadd.f32 %v779, %v866
        %v868 = vpop.f32.mrf.mxu0
        %869 = vdwg.mxu0
        %v870 = vmax.f32 %v840, 0.0
        %v871 = vmax.f32 %v843, 0.0
        %v872 = vmax.f32 %v848, 0.0
        %v873 = vmax.f32 %v851, 0.0
        %v874 = vmax.f32 %v856, 0.0
        %v875 = vmax.f32 %v859, 0.0
        %v876 = vmax.f32 %v864, 0.0
        %v877 = vmax.f32 %v867, 0.0
        %v878 = vpack.c.bf16 %v871, %v870
        %v879 = vpack.c.bf16 %v873, %v872
        %v880 = vpack.c.bf16 %v875, %v874
        %v881 = vpack.c.bf16 %v877, %v876
        %v883 = vlaneseq
        %v884 = vshrl.u32 %v883, 7
        %v885 = vsub.s32 0, %v884
        %v886 = vrot.slane %v770, %v885
        %v892 = vunpack.c.l.b16 %v765
        %v893 = vunpack.c.l.b16 %v766
        %v894 = vunpack.c.l.b16 %v767
        %v895 = vunpack.c.l.b16 %v768
        %v896 = vpack.c.b16 %v893, %v892
        %v897 = vpack.c.b16 %v895, %v894
        %v901 = vsel %vm439, %v878, 0
        %v904 = vsel %vm439, %v879, 0
        %v907 = vsel %vm439, %v880, 0
        %v910 = vsel %vm439, %v881, 0
        %912 = vmatprep.subr.bf16.mxu0 0
        %913 = vmatpush1.bf16.msra.mxu0 0
        %914 = vmatprep.subr.bf16.mxu0 0
        %915 = vmatpush1.bf16.msra.mxu0 0
        %916 = vmatprep.subr.bf16.mxu0 0
        %917 = vmatpush1.bf16.msra.mxu0 0
        %918 = vmatprep.subr.bf16.mxu0 0
        %919 = vmatpush1.bf16.msra.mxu0 0
        %920 = vmatprep.subr.bf16.mxu0 0
        %921 = vmatpush1.bf16.msra.mxu0 0
        %922 = vmatprep.subr.bf16.mxu0 0
        %923 = vmatpush1.bf16.msra.mxu0 0
        %924 = vmatprep.subr.bf16.mxu0 0
        %925 = vmatpush1.bf16.msra.mxu0 %v897
        %926 = vmatprep.subr.bf16.mxu0 0
        %927 = vmatpush1.bf16.msra.mxu0 %v896
        %928 = vmatprep.subr.bf16.mxu0 0
        %929 = vmatpush2.bf16.msra.mxu0 0
        %930 = vmatprep.subr.bf16.mxu0 0
        %931 = vmatpush2.bf16.msra.mxu0 0
        %932 = vmatprep.subr.bf16.mxu0 0
        %933 = vmatpush2.bf16.msra.mxu0 0
        %934 = vmatprep.subr.bf16.mxu0 0
        %935 = vmatpush2.bf16.msra.mxu0 0
        %936 = vmatprep.subr.bf16.mxu0 0
        %937 = vmatpush2.bf16.msra.mxu0 0
        %938 = vmatprep.subr.bf16.mxu0 0
        %939 = vmatpush2.bf16.msra.mxu0 0
        %940 = vmatprep.subr.bf16.mxu0 0
        %941 = vmatpush2.bf16.msra.mxu0 0
        %942 = vmatprep.subr.bf16.mxu0 0
        %943 = vmatpush2.bf16.msra.mxu0 0
        %944 = vmatprep.mubr.bf16.mxu0 0
        %945 = vmatmul.mubr.bf16.gmra.mxu0 %v901
        %v946 = vpop.f32.mrf.mxu0
        %v947 = vadd.f32 %v886, %v946
        %v948 = vpop.f32.mrf.mxu0
        %v949 = vpop.f32.mrf.mxu0
        %v950 = vadd.f32 %v886, %v949
        %v951 = vpop.f32.mrf.mxu0
        %952 = vmatprep.mubr.bf16.mxu0 0
        %953 = vmatmul.mubr.bf16.gmra.mxu0 %v904
        %v954 = vpop.f32.mrf.mxu0
        %v955 = vadd.f32 %v886, %v954
        %v956 = vpop.f32.mrf.mxu0
        %v957 = vpop.f32.mrf.mxu0
        %v958 = vadd.f32 %v886, %v957
        %v959 = vpop.f32.mrf.mxu0
        %960 = vmatprep.mubr.bf16.mxu0 0
        %961 = vmatmul.mubr.bf16.gmra.mxu0 %v907
        %v962 = vpop.f32.mrf.mxu0
        %v963 = vadd.f32 %v886, %v962
        %v964 = vpop.f32.mrf.mxu0
        %v965 = vpop.f32.mrf.mxu0
        %v966 = vadd.f32 %v886, %v965
        %v967 = vpop.f32.mrf.mxu0
        %968 = vmatprep.mubr.bf16.mxu0 0
        %969 = vmatmul.mubr.bf16.gmra.mxu0 %v910
        %v970 = vpop.f32.mrf.mxu0
        %v971 = vadd.f32 %v886, %v970
        %v972 = vpop.f32.mrf.mxu0
        %v973 = vpop.f32.mrf.mxu0
        %v974 = vadd.f32 %v886, %v973
        %v975 = vpop.f32.mrf.mxu0
        %976 = vdwg.mxu0
        %v977 = vadd.f32 %v947, %v749
        %v978 = vadd.f32 %v950, %v750
        %v979 = vadd.f32 %v955, %v751
        %v980 = vadd.f32 %v958, %v752
        %v981 = vadd.f32 %v963, %v753
        %v982 = vadd.f32 %v966, %v754
        %v983 = vadd.f32 %v971, %v755
        %v984 = vadd.f32 %v974, %v756
        %v985 = vmax.f32 %v977, 0.0
        %v986 = vmax.f32 %v978, 0.0
        %v987 = vmax.f32 %v979, 0.0
        %v988 = vmax.f32 %v980, 0.0
        %v989 = vmax.f32 %v981, 0.0
        %v990 = vmax.f32 %v982, 0.0
        %v991 = vmax.f32 %v983, 0.0
        %v992 = vmax.f32 %v984, 0.0
        %v993 = vsel %vm439, %v985, -inf
        %v994 = vrot.slane %v993, 4
        %v995 = vmax.f32 %v993, %v994
        %v996 = vrot.slane %v995, 2
        %v997 = vmax.f32 %v995, %v996
        %v998 = vrot.slane %v997, 1
        %v999 = vmax.f32 %v997, %v998
        %v1000 = vsel %vm439, %v986, -inf
        %v1001 = vrot.slane %v1000, 4
        %v1002 = vmax.f32 %v1000, %v1001
        %v1003 = vrot.slane %v1002, 2
        %v1004 = vmax.f32 %v1002, %v1003
        %v1005 = vrot.slane %v1004, 1
        %v1006 = vmax.f32 %v1004, %v1005
        %v1007 = vsel %vm439, %v987, -inf
        %v1008 = vrot.slane %v1007, 4
        %v1009 = vmax.f32 %v1007, %v1008
        %v1010 = vrot.slane %v1009, 2
        %v1011 = vmax.f32 %v1009, %v1010
        %v1012 = vrot.slane %v1011, 1
        %v1013 = vmax.f32 %v1011, %v1012
        %v1014 = vsel %vm439, %v988, -inf
        %v1015 = vrot.slane %v1014, 4
        %v1016 = vmax.f32 %v1014, %v1015
        %v1017 = vrot.slane %v1016, 2
        %v1018 = vmax.f32 %v1016, %v1017
        %v1019 = vrot.slane %v1018, 1
        %v1020 = vmax.f32 %v1018, %v1019
        %v1021 = vsel %vm439, %v989, -inf
        %v1022 = vrot.slane %v1021, 4
        %v1023 = vmax.f32 %v1021, %v1022
        %v1024 = vrot.slane %v1023, 2
        %v1025 = vmax.f32 %v1023, %v1024
        %v1026 = vrot.slane %v1025, 1
        %v1027 = vmax.f32 %v1025, %v1026
        %v1028 = vsel %vm439, %v990, -inf
        %v1029 = vrot.slane %v1028, 4
        %v1030 = vmax.f32 %v1028, %v1029
        %v1031 = vrot.slane %v1030, 2
        %v1032 = vmax.f32 %v1030, %v1031
        %v1033 = vrot.slane %v1032, 1
        %v1034 = vmax.f32 %v1032, %v1033
        %v1035 = vsel %vm439, %v991, -inf
        %v1036 = vrot.slane %v1035, 4
        %v1037 = vmax.f32 %v1035, %v1036
        %v1038 = vrot.slane %v1037, 2
        %v1039 = vmax.f32 %v1037, %v1038
        %v1040 = vrot.slane %v1039, 1
        %v1041 = vmax.f32 %v1039, %v1040
        %v1042 = vsel %vm439, %v992, -inf
        %v1043 = vrot.slane %v1042, 4
        %v1044 = vmax.f32 %v1042, %v1043
        %v1045 = vrot.slane %v1044, 2
        %v1046 = vmax.f32 %v1044, %v1045
        %v1047 = vrot.slane %v1046, 1
        %v1048 = vmax.f32 %v1046, %v1047
        %v1049 = vld [vmem:[%s7] sm:$0xf]
        %v1050 = vld [vmem:[%s7 + $0x4] sm:$0xf]
        %v1051 = vld [vmem:[%s7 + $0x8] sm:$0xf]
        %v1052 = vld [vmem:[%s7 + $0xc] sm:$0xf]
        %v1053 = vld [vmem:[%s8] sm:$0x1]
        %v1054 = vld [vmem:[%s9] sm:$0xf]
        %v1055 = vld [vmem:[%s9 + $0x4] sm:$0xf]
        %v1056 = vld [vmem:[%s9 + $0x8] sm:$0xf]
        %v1057 = vld [vmem:[%s9 + $0xc] sm:$0xf]
        %v1058 = vld [vmem:[%s10] sm:$0x1]
        %v1059 = vpack.c.bf16 %v999, %v999
        %v1060 = vpack.c.bf16 %v1006, %v1006
        %v1061 = vpack.c.bf16 %v1013, %v1013
        %v1062 = vpack.c.bf16 %v1020, %v1020
        %v1063 = vpack.c.bf16 %v1027, %v1027
        %v1064 = vpack.c.bf16 %v1034, %v1034
        %v1065 = vpack.c.bf16 %v1041, %v1041
        %v1066 = vpack.c.bf16 %v1048, %v1048
        %v1068 = vlaneseq
        %v1069 = vshrl.u32 %v1068, 7
        %v1070 = vsub.s32 0, %v1069
        %v1071 = vrot.slane %v1053, %v1070
        %v1081 = vunpack.c.l.b16 %v1059
        %v1082 = vunpack.c.l.b16 %v1060
        %v1083 = vunpack.c.l.b16 %v1061
        %v1084 = vunpack.c.l.b16 %v1062
        %v1085 = vunpack.c.l.b16 %v1063
        %v1086 = vunpack.c.l.b16 %v1064
        %v1087 = vunpack.c.l.b16 %v1065
        %v1088 = vunpack.c.l.b16 %v1066
        %vm1089 = vcmask 1041409
        %v1090 = vsel %vm1089, %v1082, %v1081
        %vm1091 = vcmask 1042434
        %v1092 = vsel %vm1091, %v1083, %v1090
        %vm1093 = vcmask 1043459
        %v1094 = vsel %vm1093, %v1084, %v1092
        %vm1095 = vcmask 1044484
        %v1096 = vsel %vm1095, %v1085, %v1094
        %vm1097 = vcmask 1045509
        %v1098 = vsel %vm1097, %v1086, %v1096
        %vm1099 = vcmask 1046534
        %v1100 = vsel %vm1099, %v1087, %v1098
        %vm1101 = vcmask 1047559
        %v1102 = vsel %vm1101, %v1088, %v1100
        %v1103 = vpack.c.b16 %v1102, %v1102
        %v1108 = vunpack.c.l.b16 %v1049
        %v1109 = vunpack.c.l.b16 %v1050
        %v1110 = vunpack.c.l.b16 %v1051
        %v1111 = vunpack.c.l.b16 %v1052
        %v1112 = vpack.c.b16 %v1109, %v1108
        %v1113 = vpack.c.b16 %v1111, %v1110
        %v1117 = vsel %vm439, %v1103, 0
        %1119 = vmatprep.subr.bf16.mxu0 0
        %1120 = vmatpush1.bf16.msra.mxu0 0
        %1121 = vmatprep.subr.bf16.mxu0 0
        %1122 = vmatpush1.bf16.msra.mxu0 0
        %1123 = vmatprep.subr.bf16.mxu0 0
        %1124 = vmatpush1.bf16.msra.mxu0 0
        %1125 = vmatprep.subr.bf16.mxu0 0
        %1126 = vmatpush1.bf16.msra.mxu0 0
        %1127 = vmatprep.subr.bf16.mxu0 0
        %1128 = vmatpush1.bf16.msra.mxu0 0
        %1129 = vmatprep.subr.bf16.mxu0 0
        %1130 = vmatpush1.bf16.msra.mxu0 0
        %1131 = vmatprep.subr.bf16.mxu0 0
        %1132 = vmatpush1.bf16.msra.mxu0 %v1113
        %1133 = vmatprep.subr.bf16.mxu0 0
        %1134 = vmatpush1.bf16.msra.mxu0 %v1112
        %1135 = vmatprep.subr.bf16.mxu0 0
        %1136 = vmatpush2.bf16.msra.mxu0 0
        %1137 = vmatprep.subr.bf16.mxu0 0
        %1138 = vmatpush2.bf16.msra.mxu0 0
        %1139 = vmatprep.subr.bf16.mxu0 0
        %1140 = vmatpush2.bf16.msra.mxu0 0
        %1141 = vmatprep.subr.bf16.mxu0 0
        %1142 = vmatpush2.bf16.msra.mxu0 0
        %1143 = vmatprep.subr.bf16.mxu0 0
        %1144 = vmatpush2.bf16.msra.mxu0 0
        %1145 = vmatprep.subr.bf16.mxu0 0
        %1146 = vmatpush2.bf16.msra.mxu0 0
        %1147 = vmatprep.subr.bf16.mxu0 0
        %1148 = vmatpush2.bf16.msra.mxu0 0
        %1149 = vmatprep.subr.bf16.mxu0 0
        %1150 = vmatpush2.bf16.msra.mxu0 0
        %1151 = vmatprep.mubr.bf16.mxu0 0
        %1152 = vmatmul.mubr.bf16.gmra.mxu0 %v1117
        %v1153 = vpop.f32.mrf.mxu0
        %v1154 = vadd.f32 %v1071, %v1153
        %v1155 = vpop.f32.mrf.mxu0
        %v1156 = vpop.f32.mrf.mxu0
        %v1157 = vpop.f32.mrf.mxu0
        %1158 = vdwg.mxu0
        %v1159 = vmax.f32 %v1154, 0.0
        %v1160 = vpack.c.bf16 %v1159, %v1159
        %v1162 = vlaneseq
        %v1163 = vshrl.u32 %v1162, 7
        %v1164 = vsub.s32 0, %v1163
        %v1165 = vrot.slane %v1058, %v1164
        %v1171 = vunpack.c.l.b16 %v1054
        %v1172 = vunpack.c.l.b16 %v1055
        %v1173 = vunpack.c.l.b16 %v1056
        %v1174 = vunpack.c.l.b16 %v1057
        %v1175 = vpack.c.b16 %v1172, %v1171
        %v1176 = vpack.c.b16 %v1174, %v1173
        %v1180 = vsel %vm439, %v1160, 0
        %1182 = vmatprep.subr.bf16.mxu0 0
        %1183 = vmatpush1.bf16.msra.mxu0 0
        %1184 = vmatprep.subr.bf16.mxu0 0
        %1185 = vmatpush1.bf16.msra.mxu0 0
        %1186 = vmatprep.subr.bf16.mxu0 0
        %1187 = vmatpush1.bf16.msra.mxu0 0
        %1188 = vmatprep.subr.bf16.mxu0 0
        %1189 = vmatpush1.bf16.msra.mxu0 0
        %1190 = vmatprep.subr.bf16.mxu0 0
        %1191 = vmatpush1.bf16.msra.mxu0 0
        %1192 = vmatprep.subr.bf16.mxu0 0
        %1193 = vmatpush1.bf16.msra.mxu0 0
        %1194 = vmatprep.subr.bf16.mxu0 0
        %1195 = vmatpush1.bf16.msra.mxu0 %v1176
        %1196 = vmatprep.subr.bf16.mxu0 0
        %1197 = vmatpush1.bf16.msra.mxu0 %v1175
        %1198 = vmatprep.subr.bf16.mxu0 0
        %1199 = vmatpush2.bf16.msra.mxu0 0
        %1200 = vmatprep.subr.bf16.mxu0 0
        %1201 = vmatpush2.bf16.msra.mxu0 0
        %1202 = vmatprep.subr.bf16.mxu0 0
        %1203 = vmatpush2.bf16.msra.mxu0 0
        %1204 = vmatprep.subr.bf16.mxu0 0
        %1205 = vmatpush2.bf16.msra.mxu0 0
        %1206 = vmatprep.subr.bf16.mxu0 0
        %1207 = vmatpush2.bf16.msra.mxu0 0
        %1208 = vmatprep.subr.bf16.mxu0 0
        %1209 = vmatpush2.bf16.msra.mxu0 0
        %1210 = vmatprep.subr.bf16.mxu0 0
        %1211 = vmatpush2.bf16.msra.mxu0 0
        %1212 = vmatprep.subr.bf16.mxu0 0
        %1213 = vmatpush2.bf16.msra.mxu0 0
        %1214 = vmatprep.mubr.bf16.mxu0 0
        %1215 = vmatmul.mubr.bf16.gmra.mxu0 %v1180
        %v1216 = vpop.f32.mrf.mxu0
        %v1217 = vadd.f32 %v1165, %v1216
        %v1218 = vpop.f32.mrf.mxu0
        %v1219 = vpop.f32.mrf.mxu0
        %v1220 = vpop.f32.mrf.mxu0
        %1221 = vdwg.mxu0
        %v1230 = vsel %vm1089, %v1006, %v999
        %v1231 = vsel %vm1091, %v1013, %v1230
        %v1232 = vsel %vm1093, %v1020, %v1231
        %v1233 = vsel %vm1095, %v1027, %v1232
        %v1234 = vsel %vm1097, %v1034, %v1233
        %v1235 = vsel %vm1099, %v1041, %v1234
        %v1236 = vsel %vm1101, %v1048, %v1235
        %v1238 = vadd.f32 %v1217, %v1236
        %v1239 = vmax.f32 %v1238, 0.0
        %s1240 = scalar_lea.vmem %s7, 16
        %v1241 = vld [vmem:[%s1240] sm:$0xf]
        %v1242 = vld [vmem:[%s1240 + $0x4] sm:$0xf]
        %v1243 = vld [vmem:[%s1240 + $0x8] sm:$0xf]
        %v1244 = vld [vmem:[%s1240 + $0xc] sm:$0xf]
        %s1245 = scalar_lea.vmem %s8, 1
        %v1246 = vld [vmem:[%s1245] sm:$0x1]
        %s1247 = scalar_lea.vmem %s9, 16
        %v1248 = vld [vmem:[%s1247] sm:$0xf]
        %v1249 = vld [vmem:[%s1247 + $0x4] sm:$0xf]
        %v1250 = vld [vmem:[%s1247 + $0x8] sm:$0xf]
        %v1251 = vld [vmem:[%s1247 + $0xc] sm:$0xf]
        %s1252 = scalar_lea.vmem %s10, 1
        %v1253 = vld [vmem:[%s1252] sm:$0x1]
        %v1254 = vpack.c.bf16 %v1239, %v1239
        %v1256 = vlaneseq
        %v1257 = vshrl.u32 %v1256, 7
        %v1258 = vsub.s32 0, %v1257
        %v1259 = vrot.slane %v1246, %v1258
        %v1265 = vunpack.c.l.b16 %v1241
        %v1266 = vunpack.c.l.b16 %v1242
        %v1267 = vunpack.c.l.b16 %v1243
        %v1268 = vunpack.c.l.b16 %v1244
        %v1269 = vpack.c.b16 %v1266, %v1265
        %v1270 = vpack.c.b16 %v1268, %v1267
        %v1274 = vsel %vm439, %v1254, 0
        %1276 = vmatprep.subr.bf16.mxu0 0
        %1277 = vmatpush1.bf16.msra.mxu0 0
        %1278 = vmatprep.subr.bf16.mxu0 0
        %1279 = vmatpush1.bf16.msra.mxu0 0
        %1280 = vmatprep.subr.bf16.mxu0 0
        %1281 = vmatpush1.bf16.msra.mxu0 0
        %1282 = vmatprep.subr.bf16.mxu0 0
        %1283 = vmatpush1.bf16.msra.mxu0 0
        %1284 = vmatprep.subr.bf16.mxu0 0
        %1285 = vmatpush1.bf16.msra.mxu0 0
        %1286 = vmatprep.subr.bf16.mxu0 0
        %1287 = vmatpush1.bf16.msra.mxu0 0
        %1288 = vmatprep.subr.bf16.mxu0 0
        %1289 = vmatpush1.bf16.msra.mxu0 %v1270
        %1290 = vmatprep.subr.bf16.mxu0 0
        %1291 = vmatpush1.bf16.msra.mxu0 %v1269
        %1292 = vmatprep.subr.bf16.mxu0 0
        %1293 = vmatpush2.bf16.msra.mxu0 0
        %1294 = vmatprep.subr.bf16.mxu0 0
        %1295 = vmatpush2.bf16.msra.mxu0 0
        %1296 = vmatprep.subr.bf16.mxu0 0
        %1297 = vmatpush2.bf16.msra.mxu0 0
        %1298 = vmatprep.subr.bf16.mxu0 0
        %1299 = vmatpush2.bf16.msra.mxu0 0
        %1300 = vmatprep.subr.bf16.mxu0 0
        %1301 = vmatpush2.bf16.msra.mxu0 0
        %1302 = vmatprep.subr.bf16.mxu0 0
        %1303 = vmatpush2.bf16.msra.mxu0 0
        %1304 = vmatprep.subr.bf16.mxu0 0
        %1305 = vmatpush2.bf16.msra.mxu0 0
        %1306 = vmatprep.subr.bf16.mxu0 0
        %1307 = vmatpush2.bf16.msra.mxu0 0
        %1308 = vmatprep.mubr.bf16.mxu0 0
        %1309 = vmatmul.mubr.bf16.gmra.mxu0 %v1274
        %v1310 = vpop.f32.mrf.mxu0
        %v1311 = vadd.f32 %v1259, %v1310
        %v1312 = vpop.f32.mrf.mxu0
        %v1313 = vpop.f32.mrf.mxu0
        %v1314 = vpop.f32.mrf.mxu0
        %1315 = vdwg.mxu0
        %v1316 = vmax.f32 %v1311, 0.0
        %v1317 = vpack.c.bf16 %v1316, %v1316
        %v1319 = vlaneseq
        %v1320 = vshrl.u32 %v1319, 7
        %v1321 = vsub.s32 0, %v1320
        %v1322 = vrot.slane %v1253, %v1321
        %v1328 = vunpack.c.l.b16 %v1248
        %v1329 = vunpack.c.l.b16 %v1249
        %v1330 = vunpack.c.l.b16 %v1250
        %v1331 = vunpack.c.l.b16 %v1251
        %v1332 = vpack.c.b16 %v1329, %v1328
        %v1333 = vpack.c.b16 %v1331, %v1330
        %v1337 = vsel %vm439, %v1317, 0
        %1339 = vmatprep.subr.bf16.mxu0 0
        %1340 = vmatpush1.bf16.msra.mxu0 0
        %1341 = vmatprep.subr.bf16.mxu0 0
        %1342 = vmatpush1.bf16.msra.mxu0 0
        %1343 = vmatprep.subr.bf16.mxu0 0
        %1344 = vmatpush1.bf16.msra.mxu0 0
        %1345 = vmatprep.subr.bf16.mxu0 0
        %1346 = vmatpush1.bf16.msra.mxu0 0
        %1347 = vmatprep.subr.bf16.mxu0 0
        %1348 = vmatpush1.bf16.msra.mxu0 0
        %1349 = vmatprep.subr.bf16.mxu0 0
        %1350 = vmatpush1.bf16.msra.mxu0 0
        %1351 = vmatprep.subr.bf16.mxu0 0
        %1352 = vmatpush1.bf16.msra.mxu0 %v1333
        %1353 = vmatprep.subr.bf16.mxu0 0
        %1354 = vmatpush1.bf16.msra.mxu0 %v1332
        %1355 = vmatprep.subr.bf16.mxu0 0
        %1356 = vmatpush2.bf16.msra.mxu0 0
        %1357 = vmatprep.subr.bf16.mxu0 0
        %1358 = vmatpush2.bf16.msra.mxu0 0
        %1359 = vmatprep.subr.bf16.mxu0 0
        %1360 = vmatpush2.bf16.msra.mxu0 0
        %1361 = vmatprep.subr.bf16.mxu0 0
        %1362 = vmatpush2.bf16.msra.mxu0 0
        %1363 = vmatprep.subr.bf16.mxu0 0
        %1364 = vmatpush2.bf16.msra.mxu0 0
        %1365 = vmatprep.subr.bf16.mxu0 0
        %1366 = vmatpush2.bf16.msra.mxu0 0
        %1367 = vmatprep.subr.bf16.mxu0 0
        %1368 = vmatpush2.bf16.msra.mxu0 0
        %1369 = vmatprep.subr.bf16.mxu0 0
        %1370 = vmatpush2.bf16.msra.mxu0 0
        %1371 = vmatprep.mubr.bf16.mxu0 0
        %1372 = vmatmul.mubr.bf16.gmra.mxu0 %v1337
        %v1373 = vpop.f32.mrf.mxu0
        %v1374 = vadd.f32 %v1322, %v1373
        %v1375 = vpop.f32.mrf.mxu0
        %v1376 = vpop.f32.mrf.mxu0
        %v1377 = vpop.f32.mrf.mxu0
        %1378 = vdwg.mxu0
        %v1379 = vadd.f32 %v1374, %v1239
        %v1380 = vmax.f32 %v1379, 0.0
        %1381 = vst.msk [vmem:[%s380] sm:$0xff] %vm439, %v1380
        %s1382 = sand.u32 %s269, 1
        %s1383 = scalar_lea.sflag [#allocation3], %s1382
        %s1384 = sand.u32 %s269, 1
        %s1385 = smul.addr %s1384, 8
        %s1386 = scalar_lea.vmem [#allocation2], %s1385
        // Predicated region
        $region65: #{extraction_block_forward.1} parent=63 // pred_check
          %p1387 = pneg %p279
        $region66: #{extraction_block_forward.1} parent=63 // pred_check_branch
          %1389 = sbr.rel (%p1387) target = $region68
        $region67: #{extraction_block_forward.1} parent=63 // pred_region
          %s1391 = ssub.s32 128, 128
          %1392 = vsyncadd %s1383, %s1391
          %s1393 = smul.addr %s25, 128
          %s1394 = scalar_lea.hbm %s11, %s1393
          %s1396 = sshll.u32 %s1386, 4
          %s1397 = int_to_ptr.vmem [resolvable:$true] %s1396
          %1399 = dma.vmem_to_hbm [thread:$0]  %s1397, 128, %s1394, %s1383
        $region68: #{extraction_block_forward.1} parent=63 // pred_fallthru
          _
      $region64: #{extraction_block_forward.1} parent=5 // pred_fallthru
        _
      %p1400 = scmp.le.s32.totalorder 2, %s20
      // Predicated region
      $region69: #{extraction_block_forward.1} parent=5 // pred_check
        %p1401 = pneg %p1400
      $region70: #{extraction_block_forward.1} parent=5 // pred_check_branch
        %1403 = sbr.rel (%p1401) target = $region72
      $region71: #{extraction_block_forward.1} parent=5 // pred_region
        %s1404 = ssub.s32 %s20, 2
        // Predicated region
        $region73: #{extraction_block_forward.1} parent=71 // pred_check
          %p1405 = pneg %p285
        $region74: #{extraction_block_forward.1} parent=71 // pred_check_branch
          %1407 = sbr.rel (%p1405) target = $region76
        $region75: #{extraction_block_forward.1} parent=71 // pred_region
          %s1408 = sand.u32 %s270, 1
          %s1409 = scalar_lea.sflag [#allocation3], %s1408
          %s1410 = sand.u32 %s270, 1
          %s1411 = smul.addr %s1410, 8
          %s1412 = scalar_lea.vmem [#allocation2], %s1411
          %1413 = dma.done %s1409, 128
        $region76: #{extraction_block_forward.1} parent=71 // pred_fallthru
          _
      $region72: #{extraction_block_forward.1} parent=5 // pred_fallthru
        _
    $region6: #{extraction_block_forward.1} parent=1 // loop_footer
      %s24 = sadd.s32 1, %s20
    $region7: #{extraction_block_forward.1} parent=1 // loop_footer_branch
      %19 = sbr.rel target = $region3
    $region8: #{extraction_block_forward.1} parent=1 // loop_exit
      _
    %1414 = vsyncpa [#allocation3], 1
    %s1415 = scalar_lea.sflag [#allocation3], 1
    %1416 = vsyncpa %s1415, 1

</llo_original>
